<compile_context>
chip_gen: v5e
topology: v5e:2x2
jax: 0.10.0
libtpu: 0.0.40
codegen_flags: <defaults>
</compile_context>

<pallas_src>
import functools

import jax
import jax.numpy as jnp
from jax.experimental import pallas as pl
from jax.experimental.pallas import tpu as pltpu


def _round_up(x, m):
    return (x + m - 1) // m * m


def _vmem_limit_bytes():
    """~110 MiB on v5e/v6e (128 MiB physical), ~56 MiB on v7x (64 MiB)."""
    try:
        cap = int(pltpu.get_tpu_info().vmem_capacity_bytes)
    except Exception:
        cap = 64 * 1024 * 1024
    return max(32 * 1024 * 1024, min(cap - 8 * 1024 * 1024, 110 * 1024 * 1024))


# ----------------------------- Pallas kernel ------------------------------- #

def gnn_fused_kernel(h0_ref, w_ref, lp_ref, g_ref, s_ref, norm_ref, eemb_ref,
                     deginv_ref, out_ref,
                     h_sc, rep_sc, xb_sc, x_sc, aggr_sc,
                     *, num_layers, resident):
    """Fused GCN stack.  grid = (layer, edge_block), both sequential.

    Per layer:    x      = h @ W + b                       (prologue, ke == 0)
                  msg_e  = norm_e * relu(x[row_e] + eemb_e)  (gather = G_blk @ x)
                  aggr_i = sum_e msg_e scattered to col_e     (scatter = S_blk @ msg)
                  h      = BN(aggr + relu(x + root) / deg)  [+ ReLU except last layer]
                  node_rep += h
    Final step:   out = node_rep  (mean pool + head run outside in XLA)
    """
    l = pl.program_id(0)
    ke = pl.program_id(1)
    last_ke = pl.num_programs(1) - 1
    lp = lp_ref[0]                      # (4, D): rows = b, root, bn_scale, bn_shift

    # ---- layer prologue: refresh x = Linear(h), zero the edge accumulator ----
    @pl.when(ke == 0)
    def _():
        @pl.when(l == 0)
        def _():
            h_sc[...] = h0_ref[...]
            rep_sc[...] = h0_ref[...]        # h_list[0] term of the layer sum
        x = jnp.dot(h_sc[...].astype(jnp.bfloat16), w_ref[0],
                    preferred_element_type=jnp.float32) + lp[0:1, :]
        x_sc[...] = x
        xb_sc[...] = x.astype(jnp.bfloat16)  # written once, reused by every edge block
        aggr_sc[...] = jnp.zeros_like(aggr_sc)

    # ---- edge block: gather -> message -> scatter-add ----
    eb = ke if resident else 0               # resident: slice the in-VMEM slab
    g_blk = g_ref[eb]                        # (te, Np) int8 0/1
    s_blk = s_ref[eb]                        # (Np, te) int8 0/1
    nrm = norm_ref[eb]                       # (te, 1)  f32 GCN edge normalization
    x_j = jnp.dot(g_blk.astype(jnp.bfloat16), xb_sc[...],
                  preferred_element_type=jnp.float32)
    msg = nrm * jnp.maximum(x_j + eemb_ref[0].astype(jnp.float32), 0.0)
    aggr_sc[...] += jnp.dot(s_blk.astype(jnp.bfloat16), msg.astype(jnp.bfloat16),
                            preferred_element_type=jnp.float32)

    # ---- layer epilogue: self term + BatchNorm(+ReLU), accumulate node_rep ----
    @pl.when(ke == last_ke)
    def _():
        conv = aggr_sc[...] + jnp.maximum(x_sc[...] + lp[1:2, :], 0.0) * deginv_ref[...]
        bn = conv * lp[2:3, :] + lp[3:4, :]

        @pl.when(l < num_layers - 1)
        def _():
            h_new = jnp.maximum(bn, 0.0)     # ReLU on all but the last layer
            h_sc[...] = h_new
            rep_sc[...] += h_new

        @pl.when(l == num_layers - 1)
        def _():
            out_ref[...] = rep_sc[...] + bn  # last layer: no ReLU, emit node_rep


# ------------------------------ parameters --------------------------------- #

def init_params(key, num_layer, emb_dim, num_tasks, atom_vocab, bond_vocab,
                num_atom_feats, num_bond_feats):
    keys = iter(jax.random.split(key, 128))
    params = {}
    params["atom_emb"] = [
        0.1 * jax.random.normal(next(keys), (atom_vocab, emb_dim), jnp.float32)
        for _ in range(num_atom_feats)
    ]
    layers = []
    for _ in range(num_layer):
        layers.append({
            "W": jax.random.normal(next(keys), (emb_dim, emb_dim), jnp.float32)
                 * (1.0 / emb_dim ** 0.5),
            "b": 0.01 * jax.random.normal(next(keys), (1, emb_dim), jnp.float32),
            "root": 0.1 * jax.random.normal(next(keys), (1, emb_dim), jnp.float32),
            "bond_emb": [
                0.1 * jax.random.normal(next(keys), (bond_vocab, emb_dim), jnp.float32)
                for _ in range(num_bond_feats)
            ],
            "bn_gamma": 1.0 + 0.01 * jax.random.normal(next(keys), (1, emb_dim), jnp.float32),
            "bn_beta": 0.01 * jax.random.normal(next(keys), (1, emb_dim), jnp.float32),
            "bn_mean": jnp.zeros((1, emb_dim), jnp.float32),
            "bn_var": jnp.ones((1, emb_dim), jnp.float32),
        })
    params["layers"] = layers
    params["pred_W"] = jax.random.normal(next(keys), (emb_dim, num_tasks), jnp.float32) \
                       * (1.0 / emb_dim ** 0.5)
    params["pred_b"] = 0.01 * jax.random.normal(next(keys), (1, num_tasks), jnp.float32)
    return params


# ------------------------------- forward ----------------------------------- #

def gnn_forward(params, x_atom, edge_index, edge_attr, batch, num_graphs):
    N = x_atom.shape[0]
    E = edge_index.shape[1]
    D = params["pred_W"].shape[0]
    L = len(params["layers"])
    row, col = edge_index[0], edge_index[1]

    Np = _round_up(N, 128)                      # node dim: lane / MXU aligned
    vmem_limit = _vmem_limit_bytes()

    # ---- edge-tile / residency planning against the VMEM budget ----
    te_cap = 2048 if vmem_limit >= 96 * 1024 * 1024 else 1024
    te = min(te_cap, _round_up(E, 128))         # lane-aligned edge tile

    def _fixed_bytes(te_):
        return (4 * Np * D * 4 + Np * D * 2     # f32 + bf16 scratch
                + 2 * Np * D * 4                # out block (double buffered)
                + 2 * Np * D * 4                # h0 block
                + 2 * D * D * 2                 # W block
                + 2 * 8 * D * 4                 # LP block (sublane padded)
                + 2 * te_ * D * 2               # EEMB block
                + 2 * Np * 128 * 4)             # deg_inv (lane padded)

    budget = int(0.85 * vmem_limit)
    # per-edge VMEM cost of double-buffered G+S (int8) + norm (lane padded f32)
    while te > 128 and _fixed_bytes(te) + 2 * te * (2 * Np + 512) > budget:
        te = max(128, _round_up(te // 2, 128))
    Ep = _round_up(E, te)
    n_eb = Ep // te
    resident = (_fixed_bytes(te) + 2 * n_eb * te * (2 * Np + 512)) <= budget

    # ---- glue (XLA): embedding lookups + blocked graph-structure operands ----
    # AtomEncoder: sum of per-feature embedding lookups
    h0 = sum(tab[x_atom[:, i]] for i, tab in enumerate(params["atom_emb"]))
    h0 = jnp.zeros((Np, D), jnp.float32).at[:N].set(h0.astype(jnp.float32))

    deg = jnp.zeros((N,), jnp.float32).at[row].add(1.0) + 1.0
    dis = deg ** -0.5
    norm = dis[row] * dis[col]                                     # [E]
    deg_inv = jnp.ones((Np, 1), jnp.float32).at[:N, 0].set(1.0 / deg)

    e_ids = jnp.arange(E)
    e_blk, e_in = e_ids // te, e_ids % te
    ones_i8 = jnp.ones((E,), jnp.int8)
    # pre-blocked one-hot gather / scatter (int8, exact 0/1) and edge norm
    G = jnp.zeros((n_eb, te, Np), jnp.int8).at[e_blk, e_in, row].set(ones_i8)
    S = jnp.zeros((n_eb, Np, te), jnp.int8).at[e_blk, col, e_in].set(ones_i8)
    NORM = jnp.zeros((n_eb, te, 1), jnp.float32).at[e_blk, e_in, 0].set(norm)

    eps = 1e-5
    W_l, lp_rows, eemb_l = [], [], []
    for layer_p in params["layers"]:
        W_l.append(layer_p["W"])
        scale = layer_p["bn_gamma"] / jnp.sqrt(layer_p["bn_var"] + eps)
        shift = layer_p["bn_beta"] - layer_p["bn_mean"] * scale
        lp_rows.append(jnp.concatenate(
            [layer_p["b"], layer_p["root"], scale, shift], axis=0))     # [4, D]
        # BondEncoder: sum of per-feature embedding lookups
        eemb = sum(tab[edge_attr[:, i]]
                   for i, tab in enumerate(layer_p["bond_emb"]))
        eemb_l.append(jnp.zeros((Ep, D), jnp.float32).at[:E].set(
            eemb.astype(jnp.float32)))
    W = jnp.stack(W_l).astype(jnp.bfloat16)                # [L, D, D]
    LP = jnp.stack(lp_rows).astype(jnp.float32)            # [L, 4, D]
    EEMB = jnp.stack(eemb_l).astype(jnp.bfloat16)          # [L, Ep, D]

    if resident:
        # loaded once, kept in VMEM for all layers / edge blocks
        g_spec = pl.BlockSpec((n_eb, te, Np), lambda l_, e_: (0, 0, 0))
        s_spec = pl.BlockSpec((n_eb, Np, te), lambda l_, e_: (0, 0, 0))
        n_spec = pl.BlockSpec((n_eb, te, 1), lambda l_, e_: (0, 0, 0))
    else:
        # fallback: stream one edge block at a time
        g_spec = pl.BlockSpec((1, te, Np), lambda l_, e_: (e_, 0, 0))
        s_spec = pl.BlockSpec((1, Np, te), lambda l_, e_: (e_, 0, 0))
        n_spec = pl.BlockSpec((1, te, 1), lambda l_, e_: (e_, 0, 0))

    operands = (h0, W, LP, G, S, NORM, EEMB, deg_inv)

    gs_reads = 1 if resident else L
    flops = L * (2 * Np * D * D + 4 * Ep * Np * D)
    bytes_accessed = (int(h0.size) * 4 + int(W.size) * 2 + int(LP.size) * 4
                      + int(EEMB.size) * 2 + int(deg_inv.size) * 4
                      + gs_reads * (int(G.size) + int(S.size) + int(NORM.size) * 4)
                      + Np * D * 4)

    node_rep = pl.pallas_call(
        functools.partial(gnn_fused_kernel, num_layers=L, resident=resident),
        out_shape=jax.ShapeDtypeStruct((Np, D), jnp.float32),
        grid_spec=pltpu.PrefetchScalarGridSpec(
            num_scalar_prefetch=0,
            grid=(L, n_eb),
            in_specs=[
                pl.BlockSpec((Np, D), lambda l_, e_: (0, 0)),           # h0
                pl.BlockSpec((1, D, D), lambda l_, e_: (l_, 0, 0)),     # W (per layer)
                pl.BlockSpec((1, 4, D), lambda l_, e_: (l_, 0, 0)),     # b/root/scale/shift
                g_spec,                                                 # gather (int8)
                s_spec,                                                 # scatter (int8)
                n_spec,                                                 # edge norm
                pl.BlockSpec((1, te, D), lambda l_, e_: (l_, e_, 0)),   # edge embeddings
                pl.BlockSpec((Np, 1), lambda l_, e_: (0, 0)),           # 1/deg
            ],
            out_specs=pl.BlockSpec((Np, D), lambda l_, e_: (0, 0)),
            scratch_shapes=[
                pltpu.VMEM((Np, D), jnp.float32),    # h   (current layer input)
                pltpu.VMEM((Np, D), jnp.float32),    # node_rep accumulator (h_list sum)
                pltpu.VMEM((Np, D), jnp.bfloat16),   # bf16 x (gather operand, written once)
                pltpu.VMEM((Np, D), jnp.float32),    # x = Linear(h), f32 (epilogue self term)
                pltpu.VMEM((Np, D), jnp.float32),    # edge-aggregation accumulator
            ]),
        compiler_params=pltpu.CompilerParams(
            dimension_semantics=("arbitrary", "arbitrary"),
            vmem_limit_bytes=vmem_limit),
        cost_estimate=pl.CostEstimate(
            flops=flops, transcendentals=0, bytes_accessed=bytes_accessed),
    )(*operands)

    # ---- global_mean_pool + graph_pred_linear (tiny; plain XLA) ----
    h_node = node_rep[:N]
    counts = jnp.zeros((num_graphs,), jnp.float32).at[batch].add(1.0)
    pooled = (jnp.zeros((num_graphs, D), jnp.float32).at[batch].add(h_node)
              / jnp.maximum(counts, 1.0)[:, None])
    return pooled @ params["pred_W"] + params["pred_b"]


# --------------------------------- main ------------------------------------ #

if __name__ == "__main__":
    key = jax.random.PRNGKey(0)
    N, E, D = 32, 64, 128          # nodes, directed edges, emb_dim
    NUM_LAYER, NUM_TASKS, NUM_GRAPHS = 3, 8, 2
    NUM_ATOM_FEATS, NUM_BOND_FEATS = 9, 3
    ATOM_VOCAB, BOND_VOCAB = 16, 8

    k1, k2, k3, k4, kp = jax.random.split(key, 5)
    x_atom = jax.random.randint(k1, (N, NUM_ATOM_FEATS), 0, ATOM_VOCAB)
    edge_index = jax.random.randint(k2, (2, E), 0, N)
    edge_attr = jax.random.randint(k3, (E, NUM_BOND_FEATS), 0, BOND_VOCAB)
    batch = jnp.sort(jax.random.randint(k4, (N,), 0, NUM_GRAPHS))

    params = init_params(kp, NUM_LAYER, D, NUM_TASKS,
                         ATOM_VOCAB, BOND_VOCAB, NUM_ATOM_FEATS, NUM_BOND_FEATS)

    out = gnn_forward(params, x_atom, edge_index, edge_attr, batch, NUM_GRAPHS)
    jax.block_until_ready(out)
    assert out.shape == (NUM_GRAPHS, NUM_TASKS)
    assert bool(jnp.all(jnp.isfinite(out)))
    print("KERNEL_OK")
</pallas_src>

<mosaic_0001>
module attributes {stable_mosaic.version = 11 : i64} {
  func.func @gnn_fused_kernel(%arg0: i32, %arg1: i32, %arg2: memref<128x128xf32, #tpu.memory_space<vmem>>, %arg3: memref<1x128x128xbf16, #tpu.memory_space<vmem>>, %arg4: memref<1x4x128xf32, #tpu.memory_space<vmem>>, %arg5: memref<1x128x128xi8, #tpu.memory_space<vmem>>, %arg6: memref<1x128x128xi8, #tpu.memory_space<vmem>>, %arg7: memref<1x128x1xf32, #tpu.memory_space<vmem>>, %arg8: memref<1x128x128xbf16, #tpu.memory_space<vmem>>, %arg9: memref<128x1xf32, #tpu.memory_space<vmem>>, %arg10: memref<128x128xf32, #tpu.memory_space<vmem>>, %arg11: memref<128x128xf32, #tpu.memory_space<vmem>>, %arg12: memref<128x128xf32, #tpu.memory_space<vmem>>, %arg13: memref<128x128xbf16, #tpu.memory_space<vmem>>, %arg14: memref<128x128xf32, #tpu.memory_space<vmem>>, %arg15: memref<128x128xf32, #tpu.memory_space<vmem>>) attributes {dimension_semantics = [#tpu.dimension_semantics<arbitrary>, #tpu.dimension_semantics<arbitrary>], iteration_bounds = array<i64: 3, 1>, scalar_prefetch = 0 : i64, scratch_operands = 5 : i64, tpu.core_type = #tpu.core_type<tc>, window_params = [{pipeline_mode = #tpu.pipeline_mode<synchronous>, transform_indices = @transform_0, window_bounds = array<i64: 128, 128>}, {transform_indices = @transform_1, window_bounds = array<i64: 1, 128, 128>}, {transform_indices = @transform_2, window_bounds = array<i64: 1, 4, 128>}, {pipeline_mode = #tpu.pipeline_mode<synchronous>, transform_indices = @transform_3, window_bounds = array<i64: 1, 128, 128>}, {pipeline_mode = #tpu.pipeline_mode<synchronous>, transform_indices = @transform_4, window_bounds = array<i64: 1, 128, 128>}, {pipeline_mode = #tpu.pipeline_mode<synchronous>, transform_indices = @transform_5, window_bounds = array<i64: 1, 128, 1>}, {transform_indices = @transform_6, window_bounds = array<i64: 1, 128, 128>}, {pipeline_mode = #tpu.pipeline_mode<synchronous>, transform_indices = @transform_7, window_bounds = array<i64: 128, 1>}, {pipeline_mode = #tpu.pipeline_mode<synchronous>, transform_indices = @transform_8, window_bounds = array<i64: 128, 128>}]} {
    %c0 = arith.constant 0 : index
    %c0_0 = arith.constant 0 : index
    %c0_1 = arith.constant 0 : index
    %0 = vector.load %arg4[%c0, %c0_0, %c0_1] : memref<1x4x128xf32, #tpu.memory_space<vmem>>, vector<1x4x128xf32>
    %1 = vector.shape_cast %0 : vector<1x4x128xf32> to vector<4x128xf32>
    %c0_i32 = arith.constant 0 : i32
    %2 = arith.cmpi eq, %arg1, %c0_i32 : i32
    %3 = arith.extui %2 : i1 to i32
    %c0_i32_2 = arith.constant 0 : i32
    %4 = arith.cmpi ne, %3, %c0_i32_2 : i32
    scf.if %4 {
      %c0_i32_22 = arith.constant 0 : i32
      %34 = arith.cmpi eq, %arg0, %c0_i32_22 : i32
      %35 = arith.extui %34 : i1 to i32
      %c0_i32_23 = arith.constant 0 : i32
      %36 = arith.cmpi ne, %35, %c0_i32_23 : i32
      scf.if %36 {
        %c0_37 = arith.constant 0 : index
        %c0_38 = arith.constant 0 : index
        %50 = vector.load %arg2[%c0_37, %c0_38] : memref<128x128xf32, #tpu.memory_space<vmem>>, vector<128x128xf32>
        %c0_39 = arith.constant 0 : index
        %c0_40 = arith.constant 0 : index
        %51 = vector.load %arg11[%c0_39, %c0_40] : memref<128x128xf32, #tpu.memory_space<vmem>>, vector<128x128xf32>
        tpu.vector_store %arg11[%c0_39, %c0_40], %50 {strides = array<i32>} : memref<128x128xf32, #tpu.memory_space<vmem>>, vector<128x128xf32>,
        %c0_41 = arith.constant 0 : index
        %c0_42 = arith.constant 0 : index
        %52 = vector.load %arg2[%c0_41, %c0_42] : memref<128x128xf32, #tpu.memory_space<vmem>>, vector<128x128xf32>
        %c0_43 = arith.constant 0 : index
        %c0_44 = arith.constant 0 : index
        %53 = vector.load %arg12[%c0_43, %c0_44] : memref<128x128xf32, #tpu.memory_space<vmem>>, vector<128x128xf32>
        tpu.vector_store %arg12[%c0_43, %c0_44], %52 {strides = array<i32>} : memref<128x128xf32, #tpu.memory_space<vmem>>, vector<128x128xf32>,
      } else {
      }
      %c0_24 = arith.constant 0 : index
      %c0_25 = arith.constant 0 : index
      %37 = vector.load %arg11[%c0_24, %c0_25] : memref<128x128xf32, #tpu.memory_space<vmem>>, vector<128x128xf32>
      %38 = arith.truncf %37 : vector<128x128xf32> to vector<128x128xbf16>
      %c0_26 = arith.constant 0 : index
      %c0_27 = arith.constant 0 : index
      %c0_28 = arith.constant 0 : index
      %39 = vector.load %arg3[%c0_26, %c0_27, %c0_28] : memref<1x128x128xbf16, #tpu.memory_space<vmem>>, vector<1x128x128xbf16>
      %40 = vector.shape_cast %39 : vector<1x128x128xbf16> to vector<128x128xbf16>
      %cst_29 = arith.constant dense<0.000000e+00> : vector<128x128xf32>
      %41 = tpu.matmul %38, %40, %cst_29 {dimension_numbers = #tpu.dot_dimension_numbers<[1], [0], [0], [1], [0, 0, 1, 1], [], []>} : vector<128x128xbf16>, vector<128x128xbf16>, vector<128x128xf32> -> vector<128x128xf32>
      %42 = vector.extract_strided_slice %1 {offsets = [0, 0], sizes = [1, 128], strides = [1, 1]} : vector<4x128xf32> to vector<1x128xf32>
      %43 = vector.broadcast %42 : vector<1x128xf32> to vector<128x128xf32>
      %44 = arith.addf %41, %43 : vector<128x128xf32>
      %c0_30 = arith.constant 0 : index
      %c0_31 = arith.constant 0 : index
      %45 = vector.load %arg14[%c0_30, %c0_31] : memref<128x128xf32, #tpu.memory_space<vmem>>, vector<128x128xf32>
      tpu.vector_store %arg14[%c0_30, %c0_31], %44 {strides = array<i32>} : memref<128x128xf32, #tpu.memory_space<vmem>>, vector<128x128xf32>,
      %46 = arith.truncf %44 : vector<128x128xf32> to vector<128x128xbf16>
      %c0_32 = arith.constant 0 : index
      %c0_33 = arith.constant 0 : index
      %47 = vector.load %arg13[%c0_32, %c0_33] : memref<128x128xbf16, #tpu.memory_space<vmem>>, vector<128x128xbf16>
      tpu.vector_store %arg13[%c0_32, %c0_33], %46 {strides = array<i32>} : memref<128x128xbf16, #tpu.memory_space<vmem>>, vector<128x128xbf16>,
      %cst_34 = arith.constant 0.000000e+00 : f32
      %48 = vector.broadcast %cst_34 : f32 to vector<128x128xf32>
      %c0_35 = arith.constant 0 : index
      %c0_36 = arith.constant 0 : index
      %49 = vector.load %arg15[%c0_35, %c0_36] : memref<128x128xf32, #tpu.memory_space<vmem>>, vector<128x128xf32>
      tpu.vector_store %arg15[%c0_35, %c0_36], %48 {strides = array<i32>} : memref<128x128xf32, #tpu.memory_space<vmem>>, vector<128x128xf32>,
    } else {
    }
    %5 = arith.index_cast %arg1 : i32 to index
    %c0_3 = arith.constant 0 : index
    %c0_4 = arith.constant 0 : index
    %6 = vector.load %arg5[%5, %c0_3, %c0_4] : memref<1x128x128xi8, #tpu.memory_space<vmem>>, vector<1x128x128xi8>
    %7 = vector.shape_cast %6 : vector<1x128x128xi8> to vector<128x128xi8>
    %8 = arith.index_cast %arg1 : i32 to index
    %c0_5 = arith.constant 0 : index
    %c0_6 = arith.constant 0 : index
    %9 = vector.load %arg6[%8, %c0_5, %c0_6] : memref<1x128x128xi8, #tpu.memory_space<vmem>>, vector<1x128x128xi8>
    %10 = vector.shape_cast %9 : vector<1x128x128xi8> to vector<128x128xi8>
    %11 = arith.index_cast %arg1 : i32 to index
    %c0_7 = arith.constant 0 : index
    %c0_8 = arith.constant 0 : index
    %12 = vector.load %arg7[%11, %c0_7, %c0_8] : memref<1x128x1xf32, #tpu.memory_space<vmem>>, vector<1x128x1xf32>
    %13 = vector.shape_cast %12 : vector<1x128x1xf32> to vector<128x1xf32>
    %14 = arith.sitofp %7 : vector<128x128xi8> to vector<128x128xbf16>
    %c0_9 = arith.constant 0 : index
    %c0_10 = arith.constant 0 : index
    %15 = vector.load %arg13[%c0_9, %c0_10] : memref<128x128xbf16, #tpu.memory_space<vmem>>, vector<128x128xbf16>
    %cst = arith.constant dense<0.000000e+00> : vector<128x128xf32>
    %16 = tpu.matmul %14, %15, %cst {dimension_numbers = #tpu.dot_dimension_numbers<[1], [0], [0], [1], [0, 0, 1, 1], [], []>} : vector<128x128xbf16>, vector<128x128xbf16>, vector<128x128xf32> -> vector<128x128xf32>
    %c0_11 = arith.constant 0 : index
    %c0_12 = arith.constant 0 : index
    %c0_13 = arith.constant 0 : index
    %17 = vector.load %arg8[%c0_11, %c0_12, %c0_13] : memref<1x128x128xbf16, #tpu.memory_space<vmem>>, vector<1x128x128xbf16>
    %18 = vector.shape_cast %17 : vector<1x128x128xbf16> to vector<128x128xbf16>
    %19 = arith.extf %18 : vector<128x128xbf16> to vector<128x128xf32>
    %20 = arith.addf %16, %19 : vector<128x128xf32>
    %cst_14 = arith.constant 0.000000e+00 : f32
    %21 = vector.broadcast %cst_14 : f32 to vector<128x128xf32>
    %22 = arith.maximumf %20, %21 : vector<128x128xf32>
    %23 = vector.broadcast %13 : vector<128x1xf32> to vector<128x128xf32>
    %24 = arith.mulf %23, %22 : vector<128x128xf32>
    %c0_15 = arith.constant 0 : index
    %c0_16 = arith.constant 0 : index
    %25 = vector.load %arg15[%c0_15, %c0_16] : memref<128x128xf32, #tpu.memory_space<vmem>>, vector<128x128xf32>
    %26 = arith.sitofp %10 : vector<128x128xi8> to vector<128x128xbf16>
    %27 = arith.truncf %24 : vector<128x128xf32> to vector<128x128xbf16>
    %cst_17 = arith.constant dense<0.000000e+00> : vector<128x128xf32>
    %28 = tpu.matmul %26, %27, %cst_17 {dimension_numbers = #tpu.dot_dimension_numbers<[1], [0], [0], [1], [0, 0, 1, 1], [], []>} : vector<128x128xbf16>, vector<128x128xbf16>, vector<128x128xf32> -> vector<128x128xf32>
    %29 = arith.addf %25, %28 : vector<128x128xf32>
    %c0_18 = arith.constant 0 : index
    %c0_19 = arith.constant 0 : index
    %30 = vector.load %arg15[%c0_18, %c0_19] : memref<128x128xf32, #tpu.memory_space<vmem>>, vector<128x128xf32>
    tpu.vector_store %arg15[%c0_18, %c0_19], %29 {strides = array<i32>} : memref<128x128xf32, #tpu.memory_space<vmem>>, vector<128x128xf32>,
    %c0_i32_20 = arith.constant 0 : i32
    %31 = arith.cmpi eq, %arg1, %c0_i32_20 : i32
    %32 = arith.extui %31 : i1 to i32
    %c0_i32_21 = arith.constant 0 : i32
    %33 = arith.cmpi ne, %32, %c0_i32_21 : i32
    scf.if %33 {
      %c0_22 = arith.constant 0 : index
      %c0_23 = arith.constant 0 : index
      %34 = vector.load %arg15[%c0_22, %c0_23] : memref<128x128xf32, #tpu.memory_space<vmem>>, vector<128x128xf32>
      %c0_24 = arith.constant 0 : index
      %c0_25 = arith.constant 0 : index
      %35 = vector.load %arg14[%c0_24, %c0_25] : memref<128x128xf32, #tpu.memory_space<vmem>>, vector<128x128xf32>
      %36 = vector.extract_strided_slice %1 {offsets = [1, 0], sizes = [1, 128], strides = [1, 1]} : vector<4x128xf32> to vector<1x128xf32>
      %37 = vector.broadcast %36 : vector<1x128xf32> to vector<128x128xf32>
      %38 = arith.addf %35, %37 : vector<128x128xf32>
      %cst_26 = arith.constant 0.000000e+00 : f32
      %39 = vector.broadcast %cst_26 : f32 to vector<128x128xf32>
      %40 = arith.maximumf %38, %39 : vector<128x128xf32>
      %c0_27 = arith.constant 0 : index
      %c0_28 = arith.constant 0 : index
      %41 = vector.load %arg9[%c0_27, %c0_28] : memref<128x1xf32, #tpu.memory_space<vmem>>, vector<128x1xf32>
      %42 = vector.broadcast %41 : vector<128x1xf32> to vector<128x128xf32>
      %43 = arith.mulf %40, %42 : vector<128x128xf32>
      %44 = arith.addf %34, %43 : vector<128x128xf32>
      %45 = vector.extract_strided_slice %1 {offsets = [2, 0], sizes = [1, 128], strides = [1, 1]} : vector<4x128xf32> to vector<1x128xf32>
      %46 = vector.broadcast %45 : vector<1x128xf32> to vector<128x128xf32>
      %47 = arith.mulf %44, %46 : vector<128x128xf32>
      %48 = vector.extract_strided_slice %1 {offsets = [3, 0], sizes = [1, 128], strides = [1, 1]} : vector<4x128xf32> to vector<1x128xf32>
      %49 = vector.broadcast %48 : vector<1x128xf32> to vector<128x128xf32>
      %50 = arith.addf %47, %49 : vector<128x128xf32>
      %c2_i32 = arith.constant 2 : i32
      %51 = arith.cmpi slt, %arg0, %c2_i32 : i32
      %52 = arith.extui %51 : i1 to i32
      %c0_i32_29 = arith.constant 0 : i32
      %53 = arith.cmpi ne, %52, %c0_i32_29 : i32
      scf.if %53 {
        %cst_32 = arith.constant 0.000000e+00 : f32
        %57 = vector.broadcast %cst_32 : f32 to vector<128x128xf32>
        %58 = arith.maximumf %50, %57 : vector<128x128xf32>
        %c0_33 = arith.constant 0 : index
        %c0_34 = arith.constant 0 : index
        %59 = vector.load %arg11[%c0_33, %c0_34] : memref<128x128xf32, #tpu.memory_space<vmem>>, vector<128x128xf32>
        tpu.vector_store %arg11[%c0_33, %c0_34], %58 {strides = array<i32>} : memref<128x128xf32, #tpu.memory_space<vmem>>, vector<128x128xf32>,
        %c0_35 = arith.constant 0 : index
        %c0_36 = arith.constant 0 : index
        %60 = vector.load %arg12[%c0_35, %c0_36] : memref<128x128xf32, #tpu.memory_space<vmem>>, vector<128x128xf32>
        %61 = arith.addf %60, %58 : vector<128x128xf32>
        %c0_37 = arith.constant 0 : index
        %c0_38 = arith.constant 0 : index
        %62 = vector.load %arg12[%c0_37, %c0_38] : memref<128x128xf32, #tpu.memory_space<vmem>>, vector<128x128xf32>
        tpu.vector_store %arg12[%c0_37, %c0_38], %61 {strides = array<i32>} : memref<128x128xf32, #tpu.memory_space<vmem>>, vector<128x128xf32>,
      } else {
      }
      %c2_i32_30 = arith.constant 2 : i32
      %54 = arith.cmpi eq, %arg0, %c2_i32_30 : i32
      %55 = arith.extui %54 : i1 to i32
      %c0_i32_31 = arith.constant 0 : i32
      %56 = arith.cmpi ne, %55, %c0_i32_31 : i32
      scf.if %56 {
        %c0_32 = arith.constant 0 : index
        %c0_33 = arith.constant 0 : index
        %57 = vector.load %arg12[%c0_32, %c0_33] : memref<128x128xf32, #tpu.memory_space<vmem>>, vector<128x128xf32>
        %58 = arith.addf %57, %50 : vector<128x128xf32>
        %c0_34 = arith.constant 0 : index
        %c0_35 = arith.constant 0 : index
        %59 = vector.load %arg10[%c0_34, %c0_35] : memref<128x128xf32, #tpu.memory_space<vmem>>, vector<128x128xf32>
        tpu.vector_store %arg10[%c0_34, %c0_35], %58 {strides = array<i32>} : memref<128x128xf32, #tpu.memory_space<vmem>>, vector<128x128xf32>,
      } else {
      }
    } else {
    }
    return
  }
  func.func @transform_0(%arg0: i32, %arg1: i32) -> (i32, i32) {
    %c0_i32 = arith.constant 0 : i32
    %c0_i32_0 = arith.constant 0 : i32
    %c0_i32_1 = arith.constant 0 : i32
    return %c0_i32, %c0_i32_0 : i32, i32
  }
  func.func @transform_1(%arg0: i32, %arg1: i32) -> (i32, i32, i32) {
    %c0_i32 = arith.constant 0 : i32
    %c0_i32_0 = arith.constant 0 : i32
    %c0_i32_1 = arith.constant 0 : i32
    return %arg0, %c0_i32, %c0_i32_0 : i32, i32, i32
  }
  func.func @transform_2(%arg0: i32, %arg1: i32) -> (i32, i32, i32) {
    %c0_i32 = arith.constant 0 : i32
    %c0_i32_0 = arith.constant 0 : i32
    %c0_i32_1 = arith.constant 0 : i32
    return %arg0, %c0_i32, %c0_i32_0 : i32, i32, i32
  }
  func.func @transform_3(%arg0: i32, %arg1: i32) -> (i32, i32, i32) {
    %c0_i32 = arith.constant 0 : i32
    %c0_i32_0 = arith.constant 0 : i32
    %c0_i32_1 = arith.constant 0 : i32
    %c0_i32_2 = arith.constant 0 : i32
    return %c0_i32, %c0_i32_0, %c0_i32_1 : i32, i32, i32
  }
  func.func @transform_4(%arg0: i32, %arg1: i32) -> (i32, i32, i32) {
    %c0_i32 = arith.constant 0 : i32
    %c0_i32_0 = arith.constant 0 : i32
    %c0_i32_1 = arith.constant 0 : i32
    %c0_i32_2 = arith.constant 0 : i32
    return %c0_i32, %c0_i32_0, %c0_i32_1 : i32, i32, i32
  }
  func.func @transform_5(%arg0: i32, %arg1: i32) -> (i32, i32, i32) {
    %c0_i32 = arith.constant 0 : i32
    %c0_i32_0 = arith.constant 0 : i32
    %c0_i32_1 = arith.constant 0 : i32
    %c0_i32_2 = arith.constant 0 : i32
    return %c0_i32, %c0_i32_0, %c0_i32_1 : i32, i32, i32
  }
  func.func @transform_6(%arg0: i32, %arg1: i32) -> (i32, i32, i32) {
    %c0_i32 = arith.constant 0 : i32
    %c0_i32_0 = arith.constant 0 : i32
    return %arg0, %arg1, %c0_i32 : i32, i32, i32
  }
  func.func @transform_7(%arg0: i32, %arg1: i32) -> (i32, i32) {
    %c0_i32 = arith.constant 0 : i32
    %c0_i32_0 = arith.constant 0 : i32
    %c0_i32_1 = arith.constant 0 : i32
    return %c0_i32, %c0_i32_0 : i32, i32
  }
  func.func @transform_8(%arg0: i32, %arg1: i32) -> (i32, i32) {
    %c0_i32 = arith.constant 0 : i32
    %c0_i32_0 = arith.constant 0 : i32
    %c0_i32_1 = arith.constant 0 : i32
    return %c0_i32, %c0_i32_0 : i32, i32
  }
}

</mosaic_0001>

<llo_original>
// kernel: tpu_custom_call.1
$region0: #{tpu_custom_call.1}
  #allocation0 [shape = 'u32[]', space=smem, size = 0x4, offset = 0x4, fixed_abs, tag = 'smem constant byte address 0x4 - core index']
  #allocation1 [shape = 'u32[72,128]{1,0:T(1,128)}', space=vmem, size = 0x9000, scoped, tag = 'internal scratch']
  #allocation2 [shape = 'f32[128,128]{1,0:T(8,128)}', space=vmem, size = 0x10000, scoped, tag = 'scratch operand']
  #allocation3 [shape = 'f32[128,128]{1,0:T(8,128)}', space=vmem, size = 0x10000, scoped, tag = 'scratch operand']
  #allocation4 [shape = 'bf16[128,128]{1,0:T(8,128)(2,1)}', space=vmem, size = 0x8000, scoped, tag = 'scratch operand']
  #allocation5 [shape = 'f32[128,128]{1,0:T(8,128)}', space=vmem, size = 0x10000, scoped, tag = 'scratch operand']
  #allocation6 [shape = 'f32[128,128]{1,0:T(8,128)}', space=vmem, size = 0x10000, scoped, tag = 'scratch operand']
  %s0 = inlined_call_operand.hbm [shape: f32[128,128], index: 0, kind: input, shape index: {}]
  %s1 = inlined_call_operand.vmem [shape: bf16[3,128,128], index: 1, kind: input, shape index: {}]
  %s2 = inlined_call_operand.hbm [shape: f32[3,4,128], index: 2, kind: input, shape index: {}]
  %s3 = inlined_call_operand.vmem [shape: s8[1,128,128], index: 3, kind: input, shape index: {}]
  %s4 = inlined_call_operand.vmem [shape: s8[1,128,128], index: 4, kind: input, shape index: {}]
  %s5 = inlined_call_operand.vmem [shape: f32[1,128,1], index: 5, kind: input, shape index: {}]
  %s6 = inlined_call_operand.hbm [shape: bf16[3,128,128], index: 6, kind: input, shape index: {}]
  %s7 = inlined_call_operand.vmem [shape: f32[128,1], index: 7, kind: input, shape index: {}]
  %s8 = inlined_call_operand.hbm [shape: f32[128,128], index: 8, kind: output, shape index: {}]
  %s9 = sld [smem:[#allocation0]]
  $region97: #{tpu_custom_call.1} parent=0
    _
  %s11 = ssub.s32 1, %s9
  %s12 = scalar_select 0, %s11, %s9
  $region1: #{tpu_custom_call.1} parent=0
    #allocation7 [shape = 'u8[65536]{0}', space=vmem, size = 0x10000, scoped, tag = 'input window, operand 0, single buffered']
    #allocation8 [shape = 's32[2]{0}', space=sflag, size = 0x8, scoped, tag = 'scoped memory for tpu_custom_call.1']
    #allocation9 [shape = 's32[2]{0}', space=sflag, size = 0x8, scoped, tag = 'scoped memory for tpu_custom_call.1']
    #allocation10 [shape = 'u8[4096]{0}', space=vmem, size = 0x1000, scoped, tag = 'input window, operand 2']
    #allocation11 [shape = 's32[2]{0}', space=sflag, size = 0x8, scoped, tag = 'scoped memory for tpu_custom_call.1']
    #allocation12 [shape = 'u8[65536]{0}', space=vmem, size = 0x10000, scoped, tag = 'input window, operand 6']
    #allocation13 [shape = 'u8[65536]{0}', space=vmem, size = 0x10000, scoped, tag = 'output window, operand 0, single buffered']
    %13 = vsyncpa [#allocation8], 0
    %14 = vsyncpa [#allocation11], 0
    %s15 = scalar_lea.sflag [#allocation11], 1
    %16 = vsyncpa %s15, 0
    %17 = vsyncpa [#allocation9], 0
    loop: start=0, step=1, limit=5
    $region2: #{tpu_custom_call.1} parent=1 // loop_pre_header
      _
    $region3: #{tpu_custom_call.1} parent=1 // loop_header
      %s19 = sphi 0, %s23
      %p20 = scmp.ge.s32.totalorder %s19, 5
      %s26 = sphi 0, %s38
      %s27 = sphi 0, %s34
      %s28 = sphi 0, %s26
      %s29 = sphi 0, %s27
      %s30 = sphi 0, %s28
      %s31 = sphi 0, %s29
      %s39 = sphi 0, %s39
      %s41 = sphi 0, %s39
      %s42 = sphi 0, %s41
      %s56 = sphi 0, %s42
      %s62 = sphi 0, %s64
      %s65 = sphi 0, %s62
      %s66 = sphi 0, %s65
      %s82 = sphi 0, %s66
      %s88 = sphi 0, %s90
      %s91 = sphi 0, %s88
      %s92 = sphi 0, %s91
      %s108 = sphi 0, %s92
      %s112 = sphi 0, %s112
      %s114 = sphi 0, %s112
      %s115 = sphi 0, %s114
      %s129 = sphi 0, %s115
      %s133 = sphi 0, %s133
      %s135 = sphi 0, %s133
      %s136 = sphi 0, %s135
      %s150 = sphi 0, %s136
      %s154 = sphi 0, %s154
      %s156 = sphi 0, %s154
      %s157 = sphi 0, %s156
      %s171 = sphi 0, %s157
      %s179 = sphi 0, %s181
      %s182 = sphi 0, %s179
      %s183 = sphi 0, %s182
      %s199 = sphi 0, %s183
      %s203 = sphi 0, %s203
      %s205 = sphi 0, %s203
      %s206 = sphi 0, %s205
      %s220 = sphi 0, %s206
      %s224 = sphi 0, %s224
      %s226 = sphi 0, %s224
      %s227 = sphi 0, %s226
      %s241 = sphi 0, %s227
    $region4: #{tpu_custom_call.1} parent=1 // loop_header_branch
      %22 = sbr.rel (%p20) target = $region8
    $region5: #{tpu_custom_call.1} parent=1 // loop_body
      %s24 = ssub.s32 %s19, 1
      %s25 = ssub.s32 %s19, 2
      %s32 = sadd.s32 1, %s27
      %p33 = scmp.ge.s32.totalorder %s32, 1
      %s34 = scalar_select %p33, 0, %s32
      %s35 = sadd.s32 1, %s26
      %s36 = scalar_select %p33, %s35, %s26
      %p37 = scmp.ge.s32.totalorder %s36, 3
      %s38 = scalar_select %p37, 0, %s36
      %s40 = sadd.s32 %s39, 1
      %p43 = scmp.eq.s32.totalorder %s19, 2
      %p44 = scmp.ne.s32.totalorder %s39, %s41
      %p45 = scmp.eq.s32.totalorder %s19, 0
      %p46 = por %p44, %p45
      %p47 = scmp.ne.s32.totalorder %s39, %s41
      %p48 = scmp.eq.s32.totalorder %s24, 2
      %p49 = por %p47, %p48
      %p50 = scmp.ne.s32.totalorder %s41, %s42
      %p51 = scmp.eq.s32.totalorder %s24, 0
      %p52 = por %p50, %p51
      %p53 = scmp.ne.s32.totalorder %s41, %s42
      %p54 = scmp.eq.s32.totalorder %s25, 2
      %p55 = por %p53, %p54
      %p57 = scmp.ne.s32.totalorder %s42, %s56
      %p58 = scmp.eq.s32.totalorder %s25, 0
      %p59 = por %p57, %p58
      %s60 = ssub.s32 %s26, %s38
      %p61 = scmp.eq.s32.totalorder %s60, 0
      %s63 = sadd.s32 %s62, 1
      %s64 = scalar_select %p61, %s62, %s63
      %p67 = pneg %p61
      %p68 = scmp.eq.s32.totalorder %s19, 2
      %p69 = por %p67, %p68
      %p70 = scmp.ne.s32.totalorder %s62, %s65
      %p71 = scmp.eq.s32.totalorder %s19, 0
      %p72 = por %p70, %p71
      %p73 = scmp.ne.s32.totalorder %s62, %s65
      %p74 = scmp.eq.s32.totalorder %s24, 2
      %p75 = por %p73, %p74
      %p76 = scmp.ne.s32.totalorder %s65, %s66
      %p77 = scmp.eq.s32.totalorder %s24, 0
      %p78 = por %p76, %p77
      %p79 = scmp.ne.s32.totalorder %s65, %s66
      %p80 = scmp.eq.s32.totalorder %s25, 2
      %p81 = por %p79, %p80
      %p83 = scmp.ne.s32.totalorder %s66, %s82
      %p84 = scmp.eq.s32.totalorder %s25, 0
      %p85 = por %p83, %p84
      %s86 = ssub.s32 %s26, %s38
      %p87 = scmp.eq.s32.totalorder %s86, 0
      %s89 = sadd.s32 %s88, 1
      %s90 = scalar_select %p87, %s88, %s89
      %p93 = pneg %p87
      %p94 = scmp.eq.s32.totalorder %s19, 2
      %p95 = por %p93, %p94
      %p96 = scmp.ne.s32.totalorder %s88, %s91
      %p97 = scmp.eq.s32.totalorder %s19, 0
      %p98 = por %p96, %p97
      %p99 = scmp.ne.s32.totalorder %s88, %s91
      %p100 = scmp.eq.s32.totalorder %s24, 2
      %p101 = por %p99, %p100
      %p102 = scmp.ne.s32.totalorder %s91, %s92
      %p103 = scmp.eq.s32.totalorder %s24, 0
      %p104 = por %p102, %p103
      %p105 = scmp.ne.s32.totalorder %s91, %s92
      %p106 = scmp.eq.s32.totalorder %s25, 2
      %p107 = por %p105, %p106
      %p109 = scmp.ne.s32.totalorder %s92, %s108
      %p110 = scmp.eq.s32.totalorder %s25, 0
      %p111 = por %p109, %p110
      %s113 = sadd.s32 %s112, 1
      %p116 = scmp.eq.s32.totalorder %s19, 2
      %p117 = scmp.ne.s32.totalorder %s112, %s114
      %p118 = scmp.eq.s32.totalorder %s19, 0
      %p119 = por %p117, %p118
      %p120 = scmp.ne.s32.totalorder %s112, %s114
      %p121 = scmp.eq.s32.totalorder %s24, 2
      %p122 = por %p120, %p121
      %p123 = scmp.ne.s32.totalorder %s114, %s115
      %p124 = scmp.eq.s32.totalorder %s24, 0
      %p125 = por %p123, %p124
      %p126 = scmp.ne.s32.totalorder %s114, %s115
      %p127 = scmp.eq.s32.totalorder %s25, 2
      %p128 = por %p126, %p127
      %p130 = scmp.ne.s32.totalorder %s115, %s129
      %p131 = scmp.eq.s32.totalorder %s25, 0
      %p132 = por %p130, %p131
      %s134 = sadd.s32 %s133, 1
      %p137 = scmp.eq.s32.totalorder %s19, 2
      %p138 = scmp.ne.s32.totalorder %s133, %s135
      %p139 = scmp.eq.s32.totalorder %s19, 0
      %p140 = por %p138, %p139
      %p141 = scmp.ne.s32.totalorder %s133, %s135
      %p142 = scmp.eq.s32.totalorder %s24, 2
      %p143 = por %p141, %p142
      %p144 = scmp.ne.s32.totalorder %s135, %s136
      %p145 = scmp.eq.s32.totalorder %s24, 0
      %p146 = por %p144, %p145
      %p147 = scmp.ne.s32.totalorder %s135, %s136
      %p148 = scmp.eq.s32.totalorder %s25, 2
      %p149 = por %p147, %p148
      %p151 = scmp.ne.s32.totalorder %s136, %s150
      %p152 = scmp.eq.s32.totalorder %s25, 0
      %p153 = por %p151, %p152
      %s155 = sadd.s32 %s154, 1
      %p158 = scmp.eq.s32.totalorder %s19, 2
      %p159 = scmp.ne.s32.totalorder %s154, %s156
      %p160 = scmp.eq.s32.totalorder %s19, 0
      %p161 = por %p159, %p160
      %p162 = scmp.ne.s32.totalorder %s154, %s156
      %p163 = scmp.eq.s32.totalorder %s24, 2
      %p164 = por %p162, %p163
      %p165 = scmp.ne.s32.totalorder %s156, %s157
      %p166 = scmp.eq.s32.totalorder %s24, 0
      %p167 = por %p165, %p166
      %p168 = scmp.ne.s32.totalorder %s156, %s157
      %p169 = scmp.eq.s32.totalorder %s25, 2
      %p170 = por %p168, %p169
      %p172 = scmp.ne.s32.totalorder %s157, %s171
      %p173 = scmp.eq.s32.totalorder %s25, 0
      %p174 = por %p172, %p173
      %s175 = ssub.s32 %s26, %s38
      %s176 = ssub.s32 %s27, %s34
      %s177 = sor.u32 %s175, %s176
      %p178 = scmp.eq.s32.totalorder %s177, 0
      %s180 = sadd.s32 %s179, 1
      %s181 = scalar_select %p178, %s179, %s180
      %p184 = pneg %p178
      %p185 = scmp.eq.s32.totalorder %s19, 2
      %p186 = por %p184, %p185
      %p187 = scmp.ne.s32.totalorder %s179, %s182
      %p188 = scmp.eq.s32.totalorder %s19, 0
      %p189 = por %p187, %p188
      %p190 = scmp.ne.s32.totalorder %s179, %s182
      %p191 = scmp.eq.s32.totalorder %s24, 2
      %p192 = por %p190, %p191
      %p193 = scmp.ne.s32.totalorder %s182, %s183
      %p194 = scmp.eq.s32.totalorder %s24, 0
      %p195 = por %p193, %p194
      %p196 = scmp.ne.s32.totalorder %s182, %s183
      %p197 = scmp.eq.s32.totalorder %s25, 2
      %p198 = por %p196, %p197
      %p200 = scmp.ne.s32.totalorder %s183, %s199
      %p201 = scmp.eq.s32.totalorder %s25, 0
      %p202 = por %p200, %p201
      %s204 = sadd.s32 %s203, 1
      %p207 = scmp.eq.s32.totalorder %s19, 2
      %p208 = scmp.ne.s32.totalorder %s203, %s205
      %p209 = scmp.eq.s32.totalorder %s19, 0
      %p210 = por %p208, %p209
      %p211 = scmp.ne.s32.totalorder %s203, %s205
      %p212 = scmp.eq.s32.totalorder %s24, 2
      %p213 = por %p211, %p212
      %p214 = scmp.ne.s32.totalorder %s205, %s206
      %p215 = scmp.eq.s32.totalorder %s24, 0
      %p216 = por %p214, %p215
      %p217 = scmp.ne.s32.totalorder %s205, %s206
      %p218 = scmp.eq.s32.totalorder %s25, 2
      %p219 = por %p217, %p218
      %p221 = scmp.ne.s32.totalorder %s206, %s220
      %p222 = scmp.eq.s32.totalorder %s25, 0
      %p223 = por %p221, %p222
      %s225 = sadd.s32 %s224, 1
      %p228 = scmp.eq.s32.totalorder %s19, 2
      %p229 = scmp.ne.s32.totalorder %s224, %s226
      %p230 = scmp.eq.s32.totalorder %s19, 0
      %p231 = por %p229, %p230
      %p232 = scmp.ne.s32.totalorder %s224, %s226
      %p233 = scmp.eq.s32.totalorder %s24, 2
      %p234 = por %p232, %p233
      %p235 = scmp.ne.s32.totalorder %s226, %s227
      %p236 = scmp.eq.s32.totalorder %s24, 0
      %p237 = por %p235, %p236
      %p238 = scmp.ne.s32.totalorder %s226, %s227
      %p239 = scmp.eq.s32.totalorder %s25, 2
      %p240 = por %p238, %p239
      %p242 = scmp.ne.s32.totalorder %s227, %s241
      %p243 = scmp.eq.s32.totalorder %s25, 0
      %p244 = por %p242, %p243
      %p245 = scmp.le.s32.totalorder 1, %s19
      %p246 = scmp.lt.s32.totalorder %s19, 4
      %p247 = pnand %p245, %p246
      %p248 = pneg %p247
      // Predicated region
      $region9: #{tpu_custom_call.1} parent=5 // pred_check
        _
      $region10: #{tpu_custom_call.1} parent=5 // pred_check_branch
        %250 = sbr.rel (%p247) target = $region12
      $region11: #{tpu_custom_call.1} parent=5 // pred_region
        %s251 = ssub.s32 %s19, 1
        // Predicated region
        $region13: #{tpu_custom_call.1} parent=11 // pred_check
          %p252 = pneg %p52
        $region14: #{tpu_custom_call.1} parent=11 // pred_check_branch
          %254 = sbr.rel (%p252) target = $region16
        $region15: #{tpu_custom_call.1} parent=11 // pred_region
          %256 = vsyncadd [#allocation8], 0
          %s257 = sshll.u32 %s0, 4
          %s258 = int_to_ptr.hbm [resolvable:$true] %s257
          %s259 = sshll.u32 [#allocation7], 4
          %s260 = int_to_ptr.vmem [resolvable:$true] %s259
          %265 = dma.hbm_to_vmem [thread:$0]  %s258, 2048, %s260, [#allocation8], 128, 128, 8
        $region16: #{tpu_custom_call.1} parent=11 // pred_fallthru
          _
        // Predicated region
        $region17: #{tpu_custom_call.1} parent=11 // pred_check
          %p266 = pneg %p125
        $region18: #{tpu_custom_call.1} parent=11 // pred_check_branch
          %268 = sbr.rel (%p266) target = $region20
        $region19: #{tpu_custom_call.1} parent=11 // pred_region
          _
        $region20: #{tpu_custom_call.1} parent=11 // pred_fallthru
          _
        // Predicated region
        $region21: #{tpu_custom_call.1} parent=11 // pred_check
          %p269 = pneg %p146
        $region22: #{tpu_custom_call.1} parent=11 // pred_check_branch
          %271 = sbr.rel (%p269) target = $region24
        $region23: #{tpu_custom_call.1} parent=11 // pred_region
          _
        $region24: #{tpu_custom_call.1} parent=11 // pred_fallthru
          _
        // Predicated region
        $region25: #{tpu_custom_call.1} parent=11 // pred_check
          %p272 = pneg %p167
        $region26: #{tpu_custom_call.1} parent=11 // pred_check_branch
          %274 = sbr.rel (%p272) target = $region28
        $region27: #{tpu_custom_call.1} parent=11 // pred_region
          _
        $region28: #{tpu_custom_call.1} parent=11 // pred_fallthru
          _
        // Predicated region
        $region29: #{tpu_custom_call.1} parent=11 // pred_check
          %p275 = pneg %p216
        $region30: #{tpu_custom_call.1} parent=11 // pred_check_branch
          %277 = sbr.rel (%p275) target = $region32
        $region31: #{tpu_custom_call.1} parent=11 // pred_region
          _
        $region32: #{tpu_custom_call.1} parent=11 // pred_fallthru
          _
      $region12: #{tpu_custom_call.1} parent=5 // pred_fallthru
        _
      %p278 = scmp.lt.s32.totalorder %s19, 3
      // Predicated region
      $region33: #{tpu_custom_call.1} parent=5 // pred_check
        %p279 = pneg %p278
      $region34: #{tpu_custom_call.1} parent=5 // pred_check_branch
        %281 = sbr.rel (%p279) target = $region36
      $region35: #{tpu_custom_call.1} parent=5 // pred_region
        // Predicated region
        $region37: #{tpu_custom_call.1} parent=35 // pred_check
          %p282 = pneg %p72
        $region38: #{tpu_custom_call.1} parent=35 // pred_check_branch
          %284 = sbr.rel (%p282) target = $region40
        $region39: #{tpu_custom_call.1} parent=35 // pred_region
          %p285 = scmp.lt.s32.totalorder %s26, 2
          %s286 = scalar_select %p285, %s26, 2
          %s287 = smul.addr %s286, 16
          %s288 = smul.addr %s287, 4
          %s289 = scalar_lea.vmem %s1, %s288
        $region40: #{tpu_custom_call.1} parent=35 // pred_fallthru
          _
        // Predicated region
        $region41: #{tpu_custom_call.1} parent=35 // pred_check
          %p290 = pneg %p98
        $region42: #{tpu_custom_call.1} parent=35 // pred_check_branch
          %292 = sbr.rel (%p290) target = $region44
        $region43: #{tpu_custom_call.1} parent=35 // pred_region
          %s293 = sand.u32 %s19, 1
          %s294 = scalar_lea.sflag [#allocation11], %s293
          %s295 = sand.u32 %s88, 1
          %s296 = smul.addr %s295, 4
          %s297 = scalar_lea.vmem [#allocation10], %s296
          %299 = vsyncadd %s294, 0
          %s300 = smul.addr %s26, 4
          %s301 = scalar_lea.hbm %s2, %s300
          %s303 = sshll.u32 %s301, 4
          %s304 = int_to_ptr.hbm [resolvable:$true] %s303
          %s305 = sshll.u32 %s297, 4
          %s306 = int_to_ptr.vmem [resolvable:$true] %s305
          %308 = dma.hbm_to_vmem [thread:$0]  %s304, 64, %s306, %s294
        $region44: #{tpu_custom_call.1} parent=35 // pred_fallthru
          _
        // Predicated region
        $region45: #{tpu_custom_call.1} parent=35 // pred_check
          %p309 = pneg %p189
        $region46: #{tpu_custom_call.1} parent=35 // pred_check_branch
          %311 = sbr.rel (%p309) target = $region48
        $region47: #{tpu_custom_call.1} parent=35 // pred_region
          %s312 = sand.u32 %s19, 1
          %s313 = scalar_lea.sflag [#allocation11], %s312
          %s314 = sand.u32 %s179, 1
          %s315 = smul.addr %s314, 64
          %s316 = scalar_lea.vmem [#allocation12], %s315
          %s317 = smul.u32 16, %s27
          %319 = vsyncadd %s313, 0
          %s320 = smul.addr %s26, 16
          %s321 = sadd.s32 %s317, %s320
          %s322 = smul.addr %s321, 4
          %s323 = scalar_lea.hbm %s6, %s322
          %s324 = sshll.u32 %s323, 4
          %s325 = int_to_ptr.hbm [resolvable:$true] %s324
          %s326 = sshll.u32 %s316, 4
          %s327 = int_to_ptr.vmem [resolvable:$true] %s326
          %332 = dma.hbm_to_vmem [thread:$0]  %s325, 1024, %s327, %s313, 64, 64, 4
        $region48: #{tpu_custom_call.1} parent=35 // pred_fallthru
          _
      $region36: #{tpu_custom_call.1} parent=5 // pred_fallthru
        _
      %p333 = scmp.le.s32.totalorder 1, %s19
      %p334 = scmp.lt.s32.totalorder %s19, 4
      %p335 = pnand %p333, %p334
      %p336 = pneg %p335
      // Predicated region
      $region49: #{tpu_custom_call.1} parent=5 // pred_check
        _
      $region50: #{tpu_custom_call.1} parent=5 // pred_check_branch
        %338 = sbr.rel (%p335) target = $region52
      $region51: #{tpu_custom_call.1} parent=5 // pred_region
        %s339 = ssub.s32 %s19, 1
        // Predicated region
        $region53: #{tpu_custom_call.1} parent=51 // pred_check
          %p340 = pneg %p52
        $region54: #{tpu_custom_call.1} parent=51 // pred_check_branch
          %342 = sbr.rel (%p340) target = $region56
        $region55: #{tpu_custom_call.1} parent=51 // pred_region
          %344 = dma.done [#allocation8], 2048
        $region56: #{tpu_custom_call.1} parent=51 // pred_fallthru
          _
        %s345 = sand.u32 %s24, 1
        %s346 = scalar_lea.sflag [#allocation11], %s345
        %s347 = sand.u32 %s91, 1
        %s348 = smul.addr %s347, 4
        %s349 = scalar_lea.vmem [#allocation10], %s348
        // Predicated region
        $region57: #{tpu_custom_call.1} parent=51 // pred_check
          %p350 = pneg %p104
        $region58: #{tpu_custom_call.1} parent=51 // pred_check_branch
          %352 = sbr.rel (%p350) target = $region60
        $region59: #{tpu_custom_call.1} parent=51 // pred_region
          %354 = dma.done %s346, 64
        $region60: #{tpu_custom_call.1} parent=51 // pred_fallthru
          _
        %s355 = sand.u32 %s24, 1
        %s356 = scalar_lea.sflag [#allocation11], %s355
        %s357 = sand.u32 %s182, 1
        %s358 = smul.addr %s357, 64
        %s359 = scalar_lea.vmem [#allocation12], %s358
        // Predicated region
        $region61: #{tpu_custom_call.1} parent=51 // pred_check
          %p360 = pneg %p195
        $region62: #{tpu_custom_call.1} parent=51 // pred_check_branch
          %362 = sbr.rel (%p360) target = $region64
        $region63: #{tpu_custom_call.1} parent=51 // pred_region
          %364 = dma.done %s356, 1024
        $region64: #{tpu_custom_call.1} parent=51 // pred_fallthru
          _
        %p365 = pneg %p52
        %p366 = pneg %p49
        %p367 = scmp.lt.s32.totalorder %s28, 2
        %s368 = scalar_select %p367, %s28, 2
        %s369 = smul.addr %s368, 16
        %s370 = smul.addr %s369, 4
        %s371 = scalar_lea.vmem %s1, %s370
        %p372 = pneg %p78
        %p373 = pneg %p75
        %s374 = sand.u32 %s24, 1
        %s375 = scalar_lea.sflag [#allocation11], %s374
        %s376 = sand.u32 %s91, 1
        %s377 = smul.addr %s376, 4
        %s378 = scalar_lea.vmem [#allocation10], %s377
        %p379 = pneg %p104
        %p380 = pneg %p101
        %p381 = pneg %p125
        %p382 = pneg %p122
        %p383 = pneg %p146
        %p384 = pneg %p143
        %p385 = pneg %p167
        %p386 = pneg %p164
        %s387 = sand.u32 %s24, 1
        %s388 = scalar_lea.sflag [#allocation11], %s387
        %s389 = sand.u32 %s182, 1
        %s390 = smul.addr %s389, 64
        %s391 = scalar_lea.vmem [#allocation12], %s390
        %p392 = pneg %p195
        %p393 = pneg %p192
        %p394 = pneg %p216
        %p395 = pneg %p213
        %p396 = pneg %p237
        %p397 = pneg %p234
        %p398 = scmp.lt.s32.totalorder %s28, 2
        %s399 = scalar_select %p398, %s28, 2
        %s400 = smul.addr %s399, 16
        %s401 = smul.addr %s400, 4
        %s402 = scalar_lea.vmem %s1, %s401
        %s403 = smul.u32 16, %s29
        %v404 = vld [vmem:[%s349] sm:$0xf]
        %p405 = scmp.eq.s32.totalorder %s29, 0
        // Predicated region
        $region65: #{tpu_custom_call.1} parent=51 // pred_check
          %p406 = pneg %p405
        $region66: #{tpu_custom_call.1} parent=51 // pred_check_branch
          %408 = sbr.rel (%p406) target = $region68
        $region67: #{tpu_custom_call.1} parent=51 // pred_region
          %p409 = scmp.eq.s32.totalorder %s28, 0
          // Predicated region
          $region69: #{tpu_custom_call.1} parent=67 // pred_check
            %p410 = pneg %p409
          $region70: #{tpu_custom_call.1} parent=67 // pred_check_branch
            %412 = sbr.rel (%p410) target = $region72
          $region71: #{tpu_custom_call.1} parent=67 // pred_region
            %v413 = vld [vmem:[#allocation7] sm:$0xff]
            %v414 = vld [vmem:[#allocation7 + $0x8] sm:$0xff]
            %v415 = vld [vmem:[#allocation7 + $0x10] sm:$0xff]
            %v416 = vld [vmem:[#allocation7 + $0x18] sm:$0xff]
            %v417 = vld [vmem:[#allocation7 + $0x20] sm:$0xff]
            %v418 = vld [vmem:[#allocation7 + $0x28] sm:$0xff]
            %v419 = vld [vmem:[#allocation7 + $0x30] sm:$0xff]
            %v420 = vld [vmem:[#allocation7 + $0x38] sm:$0xff]
            %v421 = vld [vmem:[#allocation7 + $0x40] sm:$0xff]
            %v422 = vld [vmem:[#allocation7 + $0x48] sm:$0xff]
            %v423 = vld [vmem:[#allocation7 + $0x50] sm:$0xff]
            %v424 = vld [vmem:[#allocation7 + $0x58] sm:$0xff]
            %v425 = vld [vmem:[#allocation7 + $0x60] sm:$0xff]
            %v426 = vld [vmem:[#allocation7 + $0x68] sm:$0xff]
            %v427 = vld [vmem:[#allocation7 + $0x70] sm:$0xff]
            %v428 = vld [vmem:[#allocation7 + $0x78] sm:$0xff]
            %429 = vst [vmem:[#allocation2] sm:$0xff] %v413
            %430 = vst [vmem:[#allocation2 + $0x8] sm:$0xff] %v414
            %431 = vst [vmem:[#allocation2 + $0x10] sm:$0xff] %v415
            %432 = vst [vmem:[#allocation2 + $0x18] sm:$0xff] %v416
            %433 = vst [vmem:[#allocation2 + $0x20] sm:$0xff] %v417
            %434 = vst [vmem:[#allocation2 + $0x28] sm:$0xff] %v418
            %435 = vst [vmem:[#allocation2 + $0x30] sm:$0xff] %v419
            %436 = vst [vmem:[#allocation2 + $0x38] sm:$0xff] %v420
            %437 = vst [vmem:[#allocation2 + $0x40] sm:$0xff] %v421
            %438 = vst [vmem:[#allocation2 + $0x48] sm:$0xff] %v422
            %439 = vst [vmem:[#allocation2 + $0x50] sm:$0xff] %v423
            %440 = vst [vmem:[#allocation2 + $0x58] sm:$0xff] %v424
            %441 = vst [vmem:[#allocation2 + $0x60] sm:$0xff] %v425
            %442 = vst [vmem:[#allocation2 + $0x68] sm:$0xff] %v426
            %443 = vst [vmem:[#allocation2 + $0x70] sm:$0xff] %v427
            %444 = vst [vmem:[#allocation2 + $0x78] sm:$0xff] %v428
            %v445 = vld [vmem:[#allocation7] sm:$0xff]
            %v446 = vld [vmem:[#allocation7 + $0x8] sm:$0xff]
            %v447 = vld [vmem:[#allocation7 + $0x10] sm:$0xff]
            %v448 = vld [vmem:[#allocation7 + $0x18] sm:$0xff]
            %v449 = vld [vmem:[#allocation7 + $0x20] sm:$0xff]
            %v450 = vld [vmem:[#allocation7 + $0x28] sm:$0xff]
            %v451 = vld [vmem:[#allocation7 + $0x30] sm:$0xff]
            %v452 = vld [vmem:[#allocation7 + $0x38] sm:$0xff]
            %v453 = vld [vmem:[#allocation7 + $0x40] sm:$0xff]
            %v454 = vld [vmem:[#allocation7 + $0x48] sm:$0xff]
            %v455 = vld [vmem:[#allocation7 + $0x50] sm:$0xff]
            %v456 = vld [vmem:[#allocation7 + $0x58] sm:$0xff]
            %v457 = vld [vmem:[#allocation7 + $0x60] sm:$0xff]
            %v458 = vld [vmem:[#allocation7 + $0x68] sm:$0xff]
            %v459 = vld [vmem:[#allocation7 + $0x70] sm:$0xff]
            %v460 = vld [vmem:[#allocation7 + $0x78] sm:$0xff]
            %461 = vst [vmem:[#allocation3] sm:$0xff] %v445
            %462 = vst [vmem:[#allocation3 + $0x8] sm:$0xff] %v446
            %463 = vst [vmem:[#allocation3 + $0x10] sm:$0xff] %v447
            %464 = vst [vmem:[#allocation3 + $0x18] sm:$0xff] %v448
            %465 = vst [vmem:[#allocation3 + $0x20] sm:$0xff] %v449
            %466 = vst [vmem:[#allocation3 + $0x28] sm:$0xff] %v450
            %467 = vst [vmem:[#allocation3 + $0x30] sm:$0xff] %v451
            %468 = vst [vmem:[#allocation3 + $0x38] sm:$0xff] %v452
            %469 = vst [vmem:[#allocation3 + $0x40] sm:$0xff] %v453
            %470 = vst [vmem:[#allocation3 + $0x48] sm:$0xff] %v454
            %471 = vst [vmem:[#allocation3 + $0x50] sm:$0xff] %v455
            %472 = vst [vmem:[#allocation3 + $0x58] sm:$0xff] %v456
            %473 = vst [vmem:[#allocation3 + $0x60] sm:$0xff] %v457
            %474 = vst [vmem:[#allocation3 + $0x68] sm:$0xff] %v458
            %475 = vst [vmem:[#allocation3 + $0x70] sm:$0xff] %v459
            %476 = vst [vmem:[#allocation3 + $0x78] sm:$0xff] %v460
          $region72: #{tpu_custom_call.1} parent=67 // pred_fallthru
            _
          %v477 = vld [vmem:[#allocation2] sm:$0xff]
          %v478 = vld [vmem:[#allocation2 + $0x8] sm:$0xff]
          %v479 = vld [vmem:[#allocation2 + $0x10] sm:$0xff]
          %v480 = vld [vmem:[#allocation2 + $0x18] sm:$0xff]
          %v481 = vld [vmem:[#allocation2 + $0x20] sm:$0xff]
          %v482 = vld [vmem:[#allocation2 + $0x28] sm:$0xff]
          %v483 = vld [vmem:[#allocation2 + $0x30] sm:$0xff]
          %v484 = vld [vmem:[#allocation2 + $0x38] sm:$0xff]
          %v485 = vld [vmem:[#allocation2 + $0x40] sm:$0xff]
          %v486 = vld [vmem:[#allocation2 + $0x48] sm:$0xff]
          %v487 = vld [vmem:[#allocation2 + $0x50] sm:$0xff]
          %v488 = vld [vmem:[#allocation2 + $0x58] sm:$0xff]
          %v489 = vld [vmem:[#allocation2 + $0x60] sm:$0xff]
          %v490 = vld [vmem:[#allocation2 + $0x68] sm:$0xff]
          %v491 = vld [vmem:[#allocation2 + $0x70] sm:$0xff]
          %v492 = vld [vmem:[#allocation2 + $0x78] sm:$0xff]
          %v493 = vpack.c.bf16 %v478, %v477
          %v494 = vpack.c.bf16 %v480, %v479
          %v495 = vpack.c.bf16 %v482, %v481
          %v496 = vpack.c.bf16 %v484, %v483
          %v497 = vpack.c.bf16 %v486, %v485
          %v498 = vpack.c.bf16 %v488, %v487
          %v499 = vpack.c.bf16 %v490, %v489
          %v500 = vpack.c.bf16 %v492, %v491
          %v501 = vld [vmem:[%s402] sm:$0xf]
          %v502 = vld [vmem:[%s402 + $0x4] sm:$0xf]
          %v503 = vld [vmem:[%s402 + $0x8] sm:$0xf]
          %v504 = vld [vmem:[%s402 + $0xc] sm:$0xf]
          %v505 = vld [vmem:[%s402 + $0x10] sm:$0xf]
          %v506 = vld [vmem:[%s402 + $0x14] sm:$0xf]
          %v507 = vld [vmem:[%s402 + $0x18] sm:$0xf]
          %v508 = vld [vmem:[%s402 + $0x1c] sm:$0xf]
          %v509 = vld [vmem:[%s402 + $0x20] sm:$0xf]
          %v510 = vld [vmem:[%s402 + $0x24] sm:$0xf]
          %v511 = vld [vmem:[%s402 + $0x28] sm:$0xf]
          %v512 = vld [vmem:[%s402 + $0x2c] sm:$0xf]
          %v513 = vld [vmem:[%s402 + $0x30] sm:$0xf]
          %v514 = vld [vmem:[%s402 + $0x34] sm:$0xf]
          %v515 = vld [vmem:[%s402 + $0x38] sm:$0xf]
          %v516 = vld [vmem:[%s402 + $0x3c] sm:$0xf]
          %v517 = vperm.slane %v404, 0
          %v534 = vunpack.c.l.b16 %v501
          %v535 = vunpack.c.l.b16 %v502
          %v536 = vunpack.c.l.b16 %v503
          %v537 = vunpack.c.l.b16 %v504
          %v538 = vunpack.c.l.b16 %v505
          %v539 = vunpack.c.l.b16 %v506
          %v540 = vunpack.c.l.b16 %v507
          %v541 = vunpack.c.l.b16 %v508
          %v542 = vunpack.c.l.b16 %v509
          %v543 = vunpack.c.l.b16 %v510
          %v544 = vunpack.c.l.b16 %v511
          %v545 = vunpack.c.l.b16 %v512
          %v546 = vunpack.c.l.b16 %v513
          %v547 = vunpack.c.l.b16 %v514
          %v548 = vunpack.c.l.b16 %v515
          %v549 = vunpack.c.l.b16 %v516
          %v550 = vpack.c.b16 %v535, %v534
          %v551 = vpack.c.b16 %v537, %v536
          %v552 = vpack.c.b16 %v539, %v538
          %v553 = vpack.c.b16 %v541, %v540
          %v554 = vpack.c.b16 %v543, %v542
          %v555 = vpack.c.b16 %v545, %v544
          %v556 = vpack.c.b16 %v547, %v546
          %v557 = vpack.c.b16 %v549, %v548
          %566 = vmatpush.bf16.msra.mxu0 %v557
          %567 = vmatpush.bf16.msra.mxu0 %v556
          %568 = vmatpush.bf16.msra.mxu0 %v555
          %569 = vmatpush.bf16.msra.mxu0 %v554
          %570 = vmatpush.bf16.msra.mxu0 %v553
          %571 = vmatpush.bf16.msra.mxu0 %v552
          %572 = vmatpush.bf16.msra.mxu0 %v551
          %573 = vmatpush.bf16.msra.mxu0 %v550
          %574 = vmatmul.bf16.gmra.mxu0 %v493
          %v575 = vpop.f32.mrf.mxu0
          %v576 = vadd.f32 %v517, %v575
          %v577 = vpop.f32.mrf.mxu0
          %v578 = vadd.f32 %v517, %v577
          %579 = vmatmul.bf16.gmra.mxu0 %v494
          %v580 = vpop.f32.mrf.mxu0
          %v581 = vadd.f32 %v517, %v580
          %v582 = vpop.f32.mrf.mxu0
          %v583 = vadd.f32 %v517, %v582
          %584 = vmatmul.bf16.gmra.mxu0 %v495
          %v585 = vpop.f32.mrf.mxu0
          %v586 = vadd.f32 %v517, %v585
          %v587 = vpop.f32.mrf.mxu0
          %v588 = vadd.f32 %v517, %v587
          %589 = vmatmul.bf16.gmra.mxu0 %v496
          %v590 = vpop.f32.mrf.mxu0
          %v591 = vadd.f32 %v517, %v590
          %v592 = vpop.f32.mrf.mxu0
          %v593 = vadd.f32 %v517, %v592
          %594 = vmatmul.bf16.gmra.mxu0 %v497
          %v595 = vpop.f32.mrf.mxu0
          %v596 = vadd.f32 %v517, %v595
          %v597 = vpop.f32.mrf.mxu0
          %v598 = vadd.f32 %v517, %v597
          %599 = vmatmul.bf16.gmra.mxu0 %v498
          %v600 = vpop.f32.mrf.mxu0
          %v601 = vadd.f32 %v517, %v600
          %v602 = vpop.f32.mrf.mxu0
          %v603 = vadd.f32 %v517, %v602
          %604 = vmatmul.bf16.gmra.mxu0 %v499
          %v605 = vpop.f32.mrf.mxu0
          %v606 = vadd.f32 %v517, %v605
          %v607 = vpop.f32.mrf.mxu0
          %v608 = vadd.f32 %v517, %v607
          %609 = vmatmul.bf16.gmra.mxu0 %v500
          %v610 = vpop.f32.mrf.mxu0
          %v611 = vadd.f32 %v517, %v610
          %v612 = vpop.f32.mrf.mxu0
          %v613 = vadd.f32 %v517, %v612
          %614 = vdwg.mxu0
          %615 = vst [vmem:[#allocation5] sm:$0xff] %v576
          %616 = vst [vmem:[#allocation5 + $0x8] sm:$0xff] %v578
          %617 = vst [vmem:[#allocation5 + $0x10] sm:$0xff] %v581
          %618 = vst [vmem:[#allocation5 + $0x18] sm:$0xff] %v583
          %619 = vst [vmem:[#allocation5 + $0x20] sm:$0xff] %v586
          %620 = vst [vmem:[#allocation5 + $0x28] sm:$0xff] %v588
          %621 = vst [vmem:[#allocation5 + $0x30] sm:$0xff] %v591
          %622 = vst [vmem:[#allocation5 + $0x38] sm:$0xff] %v593
          %623 = vst [vmem:[#allocation5 + $0x40] sm:$0xff] %v596
          %624 = vst [vmem:[#allocation5 + $0x48] sm:$0xff] %v598
          %625 = vst [vmem:[#allocation5 + $0x50] sm:$0xff] %v601
          %626 = vst [vmem:[#allocation5 + $0x58] sm:$0xff] %v603
          %627 = vst [vmem:[#allocation5 + $0x60] sm:$0xff] %v606
          %628 = vst [vmem:[#allocation5 + $0x68] sm:$0xff] %v608
          %629 = vst [vmem:[#allocation5 + $0x70] sm:$0xff] %v611
          %630 = vst [vmem:[#allocation5 + $0x78] sm:$0xff] %v613
          %v631 = vpack.c.bf16 %v576, %v576
          %v632 = vpack.c.bf16 %v578, %v578
          %v633 = vpack.c.bf16 %v581, %v581
          %v634 = vpack.c.bf16 %v583, %v583
          %v635 = vpack.c.bf16 %v586, %v586
          %v636 = vpack.c.bf16 %v588, %v588
          %v637 = vpack.c.bf16 %v591, %v591
          %v638 = vpack.c.bf16 %v593, %v593
          %v639 = vpack.c.bf16 %v596, %v596
          %v640 = vpack.c.bf16 %v598, %v598
          %v641 = vpack.c.bf16 %v601, %v601
          %v642 = vpack.c.bf16 %v603, %v603
          %v643 = vpack.c.bf16 %v606, %v606
          %v644 = vpack.c.bf16 %v608, %v608
          %v645 = vpack.c.bf16 %v611, %v611
          %v646 = vpack.c.bf16 %v613, %v613
          %647 = vst [vmem:[#allocation4] sm:$0xf] %v631
          %648 = vst [vmem:[#allocation4 + $0x4] sm:$0xf] %v632
          %649 = vst [vmem:[#allocation4 + $0x8] sm:$0xf] %v633
          %650 = vst [vmem:[#allocation4 + $0xc] sm:$0xf] %v634
          %651 = vst [vmem:[#allocation4 + $0x10] sm:$0xf] %v635
          %652 = vst [vmem:[#allocation4 + $0x14] sm:$0xf] %v636
          %653 = vst [vmem:[#allocation4 + $0x18] sm:$0xf] %v637
          %654 = vst [vmem:[#allocation4 + $0x1c] sm:$0xf] %v638
          %655 = vst [vmem:[#allocation4 + $0x20] sm:$0xf] %v639
          %656 = vst [vmem:[#allocation4 + $0x24] sm:$0xf] %v640
          %657 = vst [vmem:[#allocation4 + $0x28] sm:$0xf] %v641
          %658 = vst [vmem:[#allocation4 + $0x2c] sm:$0xf] %v642
          %659 = vst [vmem:[#allocation4 + $0x30] sm:$0xf] %v643
          %660 = vst [vmem:[#allocation4 + $0x34] sm:$0xf] %v644
          %661 = vst [vmem:[#allocation4 + $0x38] sm:$0xf] %v645
          %662 = vst [vmem:[#allocation4 + $0x3c] sm:$0xf] %v646
          %663 = vst [vmem:[#allocation6] sm:$0xff] 0.0
          %664 = vst [vmem:[#allocation6 + $0x8] sm:$0xff] 0.0
          %665 = vst [vmem:[#allocation6 + $0x10] sm:$0xff] 0.0
          %666 = vst [vmem:[#allocation6 + $0x18] sm:$0xff] 0.0
          %667 = vst [vmem:[#allocation6 + $0x20] sm:$0xff] 0.0
          %668 = vst [vmem:[#allocation6 + $0x28] sm:$0xff] 0.0
          %669 = vst [vmem:[#allocation6 + $0x30] sm:$0xff] 0.0
          %670 = vst [vmem:[#allocation6 + $0x38] sm:$0xff] 0.0
          %671 = vst [vmem:[#allocation6 + $0x40] sm:$0xff] 0.0
          %672 = vst [vmem:[#allocation6 + $0x48] sm:$0xff] 0.0
          %673 = vst [vmem:[#allocation6 + $0x50] sm:$0xff] 0.0
          %674 = vst [vmem:[#allocation6 + $0x58] sm:$0xff] 0.0
          %675 = vst [vmem:[#allocation6 + $0x60] sm:$0xff] 0.0
          %676 = vst [vmem:[#allocation6 + $0x68] sm:$0xff] 0.0
          %677 = vst [vmem:[#allocation6 + $0x70] sm:$0xff] 0.0
          %678 = vst [vmem:[#allocation6 + $0x78] sm:$0xff] 0.0
        $region68: #{tpu_custom_call.1} parent=51 // pred_fallthru
          _
        %s679 = smul.u32 %s29, 4
        %s680 = smul.addr %s679, 8
        %s681 = scalar_lea.vmem %s3, %s680
        %v682 = vld [vmem:[%s681] sm:$0xff]
        %v683 = vld [vmem:[%s681 + $0x8] sm:$0xff]
        %v684 = vld [vmem:[%s681 + $0x10] sm:$0xff]
        %v685 = vld [vmem:[%s681 + $0x18] sm:$0xff]
        %s686 = smul.addr %s679, 8
        %s687 = scalar_lea.vmem %s4, %s686
        %v688 = vld [vmem:[%s687] sm:$0xff]
        %v689 = vld [vmem:[%s687 + $0x8] sm:$0xff]
        %v690 = vld [vmem:[%s687 + $0x10] sm:$0xff]
        %v691 = vld [vmem:[%s687 + $0x18] sm:$0xff]
        %s692 = smul.u32 %s29, 128
        %s693 = scalar_lea.vmem %s5, %s692
        %v694 = vld [vmem:[%s693] sm:$0xff]
        %v695 = vld [vmem:[%s693 + $0x8] sm:$0xff]
        %v696 = vld [vmem:[%s693 + $0x10] sm:$0xff]
        %v697 = vld [vmem:[%s693 + $0x18] sm:$0xff]
        %v698 = vld [vmem:[%s693 + $0x20] sm:$0xff]
        %v699 = vld [vmem:[%s693 + $0x28] sm:$0xff]
        %v700 = vld [vmem:[%s693 + $0x30] sm:$0xff]
        %v701 = vld [vmem:[%s693 + $0x38] sm:$0xff]
        %v702 = vld [vmem:[%s693 + $0x40] sm:$0xff]
        %v703 = vld [vmem:[%s693 + $0x48] sm:$0xff]
        %v704 = vld [vmem:[%s693 + $0x50] sm:$0xff]
        %v705 = vld [vmem:[%s693 + $0x58] sm:$0xff]
        %v706 = vld [vmem:[%s693 + $0x60] sm:$0xff]
        %v707 = vld [vmem:[%s693 + $0x68] sm:$0xff]
        %v708 = vld [vmem:[%s693 + $0x70] sm:$0xff]
        %v709 = vld [vmem:[%s693 + $0x78] sm:$0xff]
        %v710 = vunpack.c.0.s8 %v682
        %v711 = vunpack.c.1.s8 %v682
        %v712 = vunpack.c.2.s8 %v682
        %v713 = vunpack.c.3.s8 %v682
        %v714 = vunpack.c.0.s8 %v683
        %v715 = vunpack.c.1.s8 %v683
        %v716 = vunpack.c.2.s8 %v683
        %v717 = vunpack.c.3.s8 %v683
        %v718 = vunpack.c.0.s8 %v684
        %v719 = vunpack.c.1.s8 %v684
        %v720 = vunpack.c.2.s8 %v684
        %v721 = vunpack.c.3.s8 %v684
        %v722 = vunpack.c.0.s8 %v685
        %v723 = vunpack.c.1.s8 %v685
        %v724 = vunpack.c.2.s8 %v685
        %v725 = vunpack.c.3.s8 %v685
        %v726 = vcvt.s32.f32 %v710
        %v727 = vcvt.s32.f32 %v711
        %v728 = vcvt.s32.f32 %v712
        %v729 = vcvt.s32.f32 %v713
        %v730 = vcvt.s32.f32 %v714
        %v731 = vcvt.s32.f32 %v715
        %v732 = vcvt.s32.f32 %v716
        %v733 = vcvt.s32.f32 %v717
        %v734 = vcvt.s32.f32 %v718
        %v735 = vcvt.s32.f32 %v719
        %v736 = vcvt.s32.f32 %v720
        %v737 = vcvt.s32.f32 %v721
        %v738 = vcvt.s32.f32 %v722
        %v739 = vcvt.s32.f32 %v723
        %v740 = vcvt.s32.f32 %v724
        %v741 = vcvt.s32.f32 %v725
        %v742 = vpack.c.bf16 %v727, %v726
        %v743 = vpack.c.bf16 %v729, %v728
        %v744 = vpack.c.bf16 %v731, %v730
        %v745 = vpack.c.bf16 %v733, %v732
        %v746 = vpack.c.bf16 %v735, %v734
        %v747 = vpack.c.bf16 %v737, %v736
        %v748 = vpack.c.bf16 %v739, %v738
        %v749 = vpack.c.bf16 %v741, %v740
        %v750 = vld [vmem:[#allocation4] sm:$0xf]
        %v751 = vld [vmem:[#allocation4 + $0x4] sm:$0xf]
        %v752 = vld [vmem:[#allocation4 + $0x8] sm:$0xf]
        %v753 = vld [vmem:[#allocation4 + $0xc] sm:$0xf]
        %v754 = vld [vmem:[#allocation4 + $0x10] sm:$0xf]
        %v755 = vld [vmem:[#allocation4 + $0x14] sm:$0xf]
        %v756 = vld [vmem:[#allocation4 + $0x18] sm:$0xf]
        %v757 = vld [vmem:[#allocation4 + $0x1c] sm:$0xf]
        %v758 = vld [vmem:[#allocation4 + $0x20] sm:$0xf]
        %v759 = vld [vmem:[#allocation4 + $0x24] sm:$0xf]
        %v760 = vld [vmem:[#allocation4 + $0x28] sm:$0xf]
        %v761 = vld [vmem:[#allocation4 + $0x2c] sm:$0xf]
        %v762 = vld [vmem:[#allocation4 + $0x30] sm:$0xf]
        %v763 = vld [vmem:[#allocation4 + $0x34] sm:$0xf]
        %v764 = vld [vmem:[#allocation4 + $0x38] sm:$0xf]
        %v765 = vld [vmem:[#allocation4 + $0x3c] sm:$0xf]
        %v766 = vld [vmem:[%s359] sm:$0xf]
        %v767 = vld [vmem:[%s359 + $0x4] sm:$0xf]
        %v768 = vld [vmem:[%s359 + $0x8] sm:$0xf]
        %v769 = vld [vmem:[%s359 + $0xc] sm:$0xf]
        %v770 = vld [vmem:[%s359 + $0x10] sm:$0xf]
        %v771 = vld [vmem:[%s359 + $0x14] sm:$0xf]
        %v772 = vld [vmem:[%s359 + $0x18] sm:$0xf]
        %v773 = vld [vmem:[%s359 + $0x1c] sm:$0xf]
        %v774 = vld [vmem:[%s359 + $0x20] sm:$0xf]
        %v775 = vld [vmem:[%s359 + $0x24] sm:$0xf]
        %v776 = vld [vmem:[%s359 + $0x28] sm:$0xf]
        %v777 = vld [vmem:[%s359 + $0x2c] sm:$0xf]
        %v778 = vld [vmem:[%s359 + $0x30] sm:$0xf]
        %v779 = vld [vmem:[%s359 + $0x34] sm:$0xf]
        %v780 = vld [vmem:[%s359 + $0x38] sm:$0xf]
        %v781 = vld [vmem:[%s359 + $0x3c] sm:$0xf]
        %v782 = vunpack.c.l.bf16 %v766
        %v783 = vunpack.c.l.bf16 %v767
        %v784 = vunpack.c.l.bf16 %v768
        %v785 = vunpack.c.l.bf16 %v769
        %v786 = vunpack.c.l.bf16 %v770
        %v787 = vunpack.c.l.bf16 %v771
        %v788 = vunpack.c.l.bf16 %v772
        %v789 = vunpack.c.l.bf16 %v773
        %v790 = vunpack.c.l.bf16 %v774
        %v791 = vunpack.c.l.bf16 %v775
        %v792 = vunpack.c.l.bf16 %v776
        %v793 = vunpack.c.l.bf16 %v777
        %v794 = vunpack.c.l.bf16 %v778
        %v795 = vunpack.c.l.bf16 %v779
        %v796 = vunpack.c.l.bf16 %v780
        %v797 = vunpack.c.l.bf16 %v781
        %v814 = vunpack.c.l.b16 %v750
        %v815 = vunpack.c.l.b16 %v751
        %v816 = vunpack.c.l.b16 %v752
        %v817 = vunpack.c.l.b16 %v753
        %v818 = vunpack.c.l.b16 %v754
        %v819 = vunpack.c.l.b16 %v755
        %v820 = vunpack.c.l.b16 %v756
        %v821 = vunpack.c.l.b16 %v757
        %v822 = vunpack.c.l.b16 %v758
        %v823 = vunpack.c.l.b16 %v759
        %v824 = vunpack.c.l.b16 %v760
        %v825 = vunpack.c.l.b16 %v761
        %v826 = vunpack.c.l.b16 %v762
        %v827 = vunpack.c.l.b16 %v763
        %v828 = vunpack.c.l.b16 %v764
        %v829 = vunpack.c.l.b16 %v765
        %v830 = vpack.c.b16 %v815, %v814
        %v831 = vpack.c.b16 %v817, %v816
        %v832 = vpack.c.b16 %v819, %v818
        %v833 = vpack.c.b16 %v821, %v820
        %v834 = vpack.c.b16 %v823, %v822
        %v835 = vpack.c.b16 %v825, %v824
        %v836 = vpack.c.b16 %v827, %v826
        %v837 = vpack.c.b16 %v829, %v828
        %846 = vmatpush.bf16.msra.mxu0 %v837
        %847 = vmatpush.bf16.msra.mxu0 %v836
        %848 = vmatpush.bf16.msra.mxu0 %v835
        %849 = vmatpush.bf16.msra.mxu0 %v834
        %850 = vmatpush.bf16.msra.mxu0 %v833
        %851 = vmatpush.bf16.msra.mxu0 %v832
        %852 = vmatpush.bf16.msra.mxu0 %v831
        %853 = vmatpush.bf16.msra.mxu0 %v830
        %854 = vmatmul.bf16.gmra.mxu0 %v742
        %v855 = vpop.f32.mrf.mxu0
        %v856 = vadd.f32 %v782, %v855
        %v857 = vpop.f32.mrf.mxu0
        %v858 = vadd.f32 %v783, %v857
        %859 = vmatmul.bf16.gmra.mxu0 %v743
        %v860 = vpop.f32.mrf.mxu0
        %v861 = vadd.f32 %v784, %v860
        %v862 = vpop.f32.mrf.mxu0
        %v863 = vadd.f32 %v785, %v862
        %864 = vmatmul.bf16.gmra.mxu0 %v744
        %v865 = vpop.f32.mrf.mxu0
        %v866 = vadd.f32 %v786, %v865
        %v867 = vpop.f32.mrf.mxu0
        %v868 = vadd.f32 %v787, %v867
        %869 = vmatmul.bf16.gmra.mxu0 %v745
        %v870 = vpop.f32.mrf.mxu0
        %v871 = vadd.f32 %v788, %v870
        %v872 = vpop.f32.mrf.mxu0
        %v873 = vadd.f32 %v789, %v872
        %874 = vmatmul.bf16.gmra.mxu0 %v746
        %v875 = vpop.f32.mrf.mxu0
        %v876 = vadd.f32 %v790, %v875
        %v877 = vpop.f32.mrf.mxu0
        %v878 = vadd.f32 %v791, %v877
        %879 = vmatmul.bf16.gmra.mxu0 %v747
        %v880 = vpop.f32.mrf.mxu0
        %v881 = vadd.f32 %v792, %v880
        %v882 = vpop.f32.mrf.mxu0
        %v883 = vadd.f32 %v793, %v882
        %884 = vmatmul.bf16.gmra.mxu0 %v748
        %v885 = vpop.f32.mrf.mxu0
        %v886 = vadd.f32 %v794, %v885
        %v887 = vpop.f32.mrf.mxu0
        %v888 = vadd.f32 %v795, %v887
        %889 = vmatmul.bf16.gmra.mxu0 %v749
        %v890 = vpop.f32.mrf.mxu0
        %v891 = vadd.f32 %v796, %v890
        %v892 = vpop.f32.mrf.mxu0
        %v893 = vadd.f32 %v797, %v892
        %894 = vdwg.mxu0
        %v895 = vmax.f32 %v856, 0.0
        %v896 = vmax.f32 %v858, 0.0
        %v897 = vmax.f32 %v861, 0.0
        %v898 = vmax.f32 %v863, 0.0
        %v899 = vmax.f32 %v866, 0.0
        %v900 = vmax.f32 %v868, 0.0
        %v901 = vmax.f32 %v871, 0.0
        %v902 = vmax.f32 %v873, 0.0
        %v903 = vmax.f32 %v876, 0.0
        %v904 = vmax.f32 %v878, 0.0
        %v905 = vmax.f32 %v881, 0.0
        %v906 = vmax.f32 %v883, 0.0
        %v907 = vmax.f32 %v886, 0.0
        %v908 = vmax.f32 %v888, 0.0
        %v909 = vmax.f32 %v891, 0.0
        %v910 = vmax.f32 %v893, 0.0
        %912 = vset.pattern.permute.xlu0 0
        %913 = vperm.xlu0 %912, %v694
        %v914 = vpop.permute.xlu0 %913
        %917 = vset.pattern.permute.xlu0 0
        %918 = vperm.xlu0 %917, %v695
        %v919 = vpop.permute.xlu0 %918
        %922 = vset.pattern.permute.xlu0 0
        %923 = vperm.xlu0 %922, %v696
        %v924 = vpop.permute.xlu0 %923
        %927 = vset.pattern.permute.xlu0 0
        %928 = vperm.xlu0 %927, %v697
        %v929 = vpop.permute.xlu0 %928
        %932 = vset.pattern.permute.xlu0 0
        %933 = vperm.xlu0 %932, %v698
        %v934 = vpop.permute.xlu0 %933
        %937 = vset.pattern.permute.xlu0 0
        %938 = vperm.xlu0 %937, %v699
        %v939 = vpop.permute.xlu0 %938
        %942 = vset.pattern.permute.xlu0 0
        %943 = vperm.xlu0 %942, %v700
        %v944 = vpop.permute.xlu0 %943
        %947 = vset.pattern.permute.xlu0 0
        %948 = vperm.xlu0 %947, %v701
        %v949 = vpop.permute.xlu0 %948
        %952 = vset.pattern.permute.xlu0 0
        %953 = vperm.xlu0 %952, %v702
        %v954 = vpop.permute.xlu0 %953
        %957 = vset.pattern.permute.xlu0 0
        %958 = vperm.xlu0 %957, %v703
        %v959 = vpop.permute.xlu0 %958
        %962 = vset.pattern.permute.xlu0 0
        %963 = vperm.xlu0 %962, %v704
        %v964 = vpop.permute.xlu0 %963
        %967 = vset.pattern.permute.xlu0 0
        %968 = vperm.xlu0 %967, %v705
        %v969 = vpop.permute.xlu0 %968
        %972 = vset.pattern.permute.xlu0 0
        %973 = vperm.xlu0 %972, %v706
        %v974 = vpop.permute.xlu0 %973
        %977 = vset.pattern.permute.xlu0 0
        %978 = vperm.xlu0 %977, %v707
        %v979 = vpop.permute.xlu0 %978
        %982 = vset.pattern.permute.xlu0 0
        %983 = vperm.xlu0 %982, %v708
        %v984 = vpop.permute.xlu0 %983
        %987 = vset.pattern.permute.xlu0 0
        %988 = vperm.xlu0 %987, %v709
        %v989 = vpop.permute.xlu0 %988
        %v991 = vmul.f32 %v914, %v895
        %v992 = vmul.f32 %v919, %v896
        %v993 = vmul.f32 %v924, %v897
        %v994 = vmul.f32 %v929, %v898
        %v995 = vmul.f32 %v934, %v899
        %v996 = vmul.f32 %v939, %v900
        %v997 = vmul.f32 %v944, %v901
        %v998 = vmul.f32 %v949, %v902
        %v999 = vmul.f32 %v954, %v903
        %v1000 = vmul.f32 %v959, %v904
        %v1001 = vmul.f32 %v964, %v905
        %v1002 = vmul.f32 %v969, %v906
        %v1003 = vmul.f32 %v974, %v907
        %v1004 = vmul.f32 %v979, %v908
        %v1005 = vmul.f32 %v984, %v909
        %v1006 = vmul.f32 %v989, %v910
        %v1007 = vld [vmem:[#allocation6] sm:$0xff]
        %v1008 = vld [vmem:[#allocation6 + $0x8] sm:$0xff]
        %v1009 = vld [vmem:[#allocation6 + $0x10] sm:$0xff]
        %v1010 = vld [vmem:[#allocation6 + $0x18] sm:$0xff]
        %v1011 = vld [vmem:[#allocation6 + $0x20] sm:$0xff]
        %v1012 = vld [vmem:[#allocation6 + $0x28] sm:$0xff]
        %v1013 = vld [vmem:[#allocation6 + $0x30] sm:$0xff]
        %v1014 = vld [vmem:[#allocation6 + $0x38] sm:$0xff]
        %v1015 = vld [vmem:[#allocation6 + $0x40] sm:$0xff]
        %v1016 = vld [vmem:[#allocation6 + $0x48] sm:$0xff]
        %v1017 = vld [vmem:[#allocation6 + $0x50] sm:$0xff]
        %v1018 = vld [vmem:[#allocation6 + $0x58] sm:$0xff]
        %v1019 = vld [vmem:[#allocation6 + $0x60] sm:$0xff]
        %v1020 = vld [vmem:[#allocation6 + $0x68] sm:$0xff]
        %v1021 = vld [vmem:[#allocation6 + $0x70] sm:$0xff]
        %v1022 = vld [vmem:[#allocation6 + $0x78] sm:$0xff]
        %v1023 = vunpack.c.0.s8 %v688
        %v1024 = vunpack.c.1.s8 %v688
        %v1025 = vunpack.c.2.s8 %v688
        %v1026 = vunpack.c.3.s8 %v688
        %v1027 = vunpack.c.0.s8 %v689
        %v1028 = vunpack.c.1.s8 %v689
        %v1029 = vunpack.c.2.s8 %v689
        %v1030 = vunpack.c.3.s8 %v689
        %v1031 = vunpack.c.0.s8 %v690
        %v1032 = vunpack.c.1.s8 %v690
        %v1033 = vunpack.c.2.s8 %v690
        %v1034 = vunpack.c.3.s8 %v690
        %v1035 = vunpack.c.0.s8 %v691
        %v1036 = vunpack.c.1.s8 %v691
        %v1037 = vunpack.c.2.s8 %v691
        %v1038 = vunpack.c.3.s8 %v691
        %v1039 = vcvt.s32.f32 %v1023
        %v1040 = vcvt.s32.f32 %v1024
        %v1041 = vcvt.s32.f32 %v1025
        %v1042 = vcvt.s32.f32 %v1026
        %v1043 = vcvt.s32.f32 %v1027
        %v1044 = vcvt.s32.f32 %v1028
        %v1045 = vcvt.s32.f32 %v1029
        %v1046 = vcvt.s32.f32 %v1030
        %v1047 = vcvt.s32.f32 %v1031
        %v1048 = vcvt.s32.f32 %v1032
        %v1049 = vcvt.s32.f32 %v1033
        %v1050 = vcvt.s32.f32 %v1034
        %v1051 = vcvt.s32.f32 %v1035
        %v1052 = vcvt.s32.f32 %v1036
        %v1053 = vcvt.s32.f32 %v1037
        %v1054 = vcvt.s32.f32 %v1038
        %v1055 = vpack.c.bf16 %v1040, %v1039
        %v1056 = vpack.c.bf16 %v1042, %v1041
        %v1057 = vpack.c.bf16 %v1044, %v1043
        %v1058 = vpack.c.bf16 %v1046, %v1045
        %v1059 = vpack.c.bf16 %v1048, %v1047
        %v1060 = vpack.c.bf16 %v1050, %v1049
        %v1061 = vpack.c.bf16 %v1052, %v1051
        %v1062 = vpack.c.bf16 %v1054, %v1053
        %v1063 = vpack.c.bf16 %v992, %v991
        %v1064 = vpack.c.bf16 %v994, %v993
        %v1065 = vpack.c.bf16 %v996, %v995
        %v1066 = vpack.c.bf16 %v998, %v997
        %v1067 = vpack.c.bf16 %v1000, %v999
        %v1068 = vpack.c.bf16 %v1002, %v1001
        %v1069 = vpack.c.bf16 %v1004, %v1003
        %v1070 = vpack.c.bf16 %v1006, %v1005
        %1071 = vmatpush.bf16.msra.mxu0 %v1070
        %1072 = vmatpush.bf16.msra.mxu0 %v1069
        %1073 = vmatpush.bf16.msra.mxu0 %v1068
        %1074 = vmatpush.bf16.msra.mxu0 %v1067
        %1075 = vmatpush.bf16.msra.mxu0 %v1066
        %1076 = vmatpush.bf16.msra.mxu0 %v1065
        %1077 = vmatpush.bf16.msra.mxu0 %v1064
        %1078 = vmatpush.bf16.msra.mxu0 %v1063
        %1079 = vmatmul.bf16.gmra.mxu0 %v1055
        %v1080 = vpop.f32.mrf.mxu0
        %v1081 = vadd.f32 0.0, %v1080
        %v1082 = vpop.f32.mrf.mxu0
        %v1083 = vadd.f32 0.0, %v1082
        %1084 = vmatmul.bf16.gmra.mxu0 %v1056
        %v1085 = vpop.f32.mrf.mxu0
        %v1086 = vadd.f32 0.0, %v1085
        %v1087 = vpop.f32.mrf.mxu0
        %v1088 = vadd.f32 0.0, %v1087
        %1089 = vmatmul.bf16.gmra.mxu0 %v1057
        %v1090 = vpop.f32.mrf.mxu0
        %v1091 = vadd.f32 0.0, %v1090
        %v1092 = vpop.f32.mrf.mxu0
        %v1093 = vadd.f32 0.0, %v1092
        %1094 = vmatmul.bf16.gmra.mxu0 %v1058
        %v1095 = vpop.f32.mrf.mxu0
        %v1096 = vadd.f32 0.0, %v1095
        %v1097 = vpop.f32.mrf.mxu0
        %v1098 = vadd.f32 0.0, %v1097
        %1099 = vmatmul.bf16.gmra.mxu0 %v1059
        %v1100 = vpop.f32.mrf.mxu0
        %v1101 = vadd.f32 0.0, %v1100
        %v1102 = vpop.f32.mrf.mxu0
        %v1103 = vadd.f32 0.0, %v1102
        %1104 = vmatmul.bf16.gmra.mxu0 %v1060
        %v1105 = vpop.f32.mrf.mxu0
        %v1106 = vadd.f32 0.0, %v1105
        %v1107 = vpop.f32.mrf.mxu0
        %v1108 = vadd.f32 0.0, %v1107
        %1109 = vmatmul.bf16.gmra.mxu0 %v1061
        %v1110 = vpop.f32.mrf.mxu0
        %v1111 = vadd.f32 0.0, %v1110
        %v1112 = vpop.f32.mrf.mxu0
        %v1113 = vadd.f32 0.0, %v1112
        %1114 = vmatmul.bf16.gmra.mxu0 %v1062
        %v1115 = vpop.f32.mrf.mxu0
        %v1116 = vadd.f32 0.0, %v1115
        %v1117 = vpop.f32.mrf.mxu0
        %v1118 = vadd.f32 0.0, %v1117
        %1119 = vdwg.mxu0
        %v1120 = vadd.f32 %v1007, %v1081
        %v1121 = vadd.f32 %v1008, %v1083
        %v1122 = vadd.f32 %v1009, %v1086
        %v1123 = vadd.f32 %v1010, %v1088
        %v1124 = vadd.f32 %v1011, %v1091
        %v1125 = vadd.f32 %v1012, %v1093
        %v1126 = vadd.f32 %v1013, %v1096
        %v1127 = vadd.f32 %v1014, %v1098
        %v1128 = vadd.f32 %v1015, %v1101
        %v1129 = vadd.f32 %v1016, %v1103
        %v1130 = vadd.f32 %v1017, %v1106
        %v1131 = vadd.f32 %v1018, %v1108
        %v1132 = vadd.f32 %v1019, %v1111
        %v1133 = vadd.f32 %v1020, %v1113
        %v1134 = vadd.f32 %v1021, %v1116
        %v1135 = vadd.f32 %v1022, %v1118
        %1136 = vst [vmem:[#allocation6] sm:$0xff] %v1120
        %1137 = vst [vmem:[#allocation6 + $0x8] sm:$0xff] %v1121
        %1138 = vst [vmem:[#allocation6 + $0x10] sm:$0xff] %v1122
        %1139 = vst [vmem:[#allocation6 + $0x18] sm:$0xff] %v1123
        %1140 = vst [vmem:[#allocation6 + $0x20] sm:$0xff] %v1124
        %1141 = vst [vmem:[#allocation6 + $0x28] sm:$0xff] %v1125
        %1142 = vst [vmem:[#allocation6 + $0x30] sm:$0xff] %v1126
        %1143 = vst [vmem:[#allocation6 + $0x38] sm:$0xff] %v1127
        %1144 = vst [vmem:[#allocation6 + $0x40] sm:$0xff] %v1128
        %1145 = vst [vmem:[#allocation6 + $0x48] sm:$0xff] %v1129
        %1146 = vst [vmem:[#allocation6 + $0x50] sm:$0xff] %v1130
        %1147 = vst [vmem:[#allocation6 + $0x58] sm:$0xff] %v1131
        %1148 = vst [vmem:[#allocation6 + $0x60] sm:$0xff] %v1132
        %1149 = vst [vmem:[#allocation6 + $0x68] sm:$0xff] %v1133
        %1150 = vst [vmem:[#allocation6 + $0x70] sm:$0xff] %v1134
        %1151 = vst [vmem:[#allocation6 + $0x78] sm:$0xff] %v1135
        // Predicated region
        $region73: #{tpu_custom_call.1} parent=51 // pred_check
          %p1152 = pneg %p405
        $region74: #{tpu_custom_call.1} parent=51 // pred_check_branch
          %1154 = sbr.rel (%p1152) target = $region76
        $region75: #{tpu_custom_call.1} parent=51 // pred_region
          %v1155 = vld [vmem:[#allocation6] sm:$0xff]
          %v1156 = vld [vmem:[#allocation6 + $0x8] sm:$0xff]
          %v1157 = vld [vmem:[#allocation6 + $0x10] sm:$0xff]
          %v1158 = vld [vmem:[#allocation6 + $0x18] sm:$0xff]
          %v1159 = vld [vmem:[#allocation6 + $0x20] sm:$0xff]
          %v1160 = vld [vmem:[#allocation6 + $0x28] sm:$0xff]
          %v1161 = vld [vmem:[#allocation6 + $0x30] sm:$0xff]
          %v1162 = vld [vmem:[#allocation6 + $0x38] sm:$0xff]
          %v1163 = vld [vmem:[#allocation6 + $0x40] sm:$0xff]
          %v1164 = vld [vmem:[#allocation6 + $0x48] sm:$0xff]
          %v1165 = vld [vmem:[#allocation6 + $0x50] sm:$0xff]
          %v1166 = vld [vmem:[#allocation6 + $0x58] sm:$0xff]
          %v1167 = vld [vmem:[#allocation6 + $0x60] sm:$0xff]
          %v1168 = vld [vmem:[#allocation6 + $0x68] sm:$0xff]
          %v1169 = vld [vmem:[#allocation6 + $0x70] sm:$0xff]
          %v1170 = vld [vmem:[#allocation6 + $0x78] sm:$0xff]
          %v1171 = vld [vmem:[#allocation5] sm:$0xff]
          %v1172 = vld [vmem:[#allocation5 + $0x8] sm:$0xff]
          %v1173 = vld [vmem:[#allocation5 + $0x10] sm:$0xff]
          %v1174 = vld [vmem:[#allocation5 + $0x18] sm:$0xff]
          %v1175 = vld [vmem:[#allocation5 + $0x20] sm:$0xff]
          %v1176 = vld [vmem:[#allocation5 + $0x28] sm:$0xff]
          %v1177 = vld [vmem:[#allocation5 + $0x30] sm:$0xff]
          %v1178 = vld [vmem:[#allocation5 + $0x38] sm:$0xff]
          %v1179 = vld [vmem:[#allocation5 + $0x40] sm:$0xff]
          %v1180 = vld [vmem:[#allocation5 + $0x48] sm:$0xff]
          %v1181 = vld [vmem:[#allocation5 + $0x50] sm:$0xff]
          %v1182 = vld [vmem:[#allocation5 + $0x58] sm:$0xff]
          %v1183 = vld [vmem:[#allocation5 + $0x60] sm:$0xff]
          %v1184 = vld [vmem:[#allocation5 + $0x68] sm:$0xff]
          %v1185 = vld [vmem:[#allocation5 + $0x70] sm:$0xff]
          %v1186 = vld [vmem:[#allocation5 + $0x78] sm:$0xff]
          %v1187 = vperm.slane %v404, 1
          %v1188 = vadd.f32 %v1171, %v1187
          %v1189 = vadd.f32 %v1172, %v1187
          %v1190 = vadd.f32 %v1173, %v1187
          %v1191 = vadd.f32 %v1174, %v1187
          %v1192 = vadd.f32 %v1175, %v1187
          %v1193 = vadd.f32 %v1176, %v1187
          %v1194 = vadd.f32 %v1177, %v1187
          %v1195 = vadd.f32 %v1178, %v1187
          %v1196 = vadd.f32 %v1179, %v1187
          %v1197 = vadd.f32 %v1180, %v1187
          %v1198 = vadd.f32 %v1181, %v1187
          %v1199 = vadd.f32 %v1182, %v1187
          %v1200 = vadd.f32 %v1183, %v1187
          %v1201 = vadd.f32 %v1184, %v1187
          %v1202 = vadd.f32 %v1185, %v1187
          %v1203 = vadd.f32 %v1186, %v1187
          %v1204 = vmax.f32 %v1188, 0.0
          %v1205 = vmax.f32 %v1189, 0.0
          %v1206 = vmax.f32 %v1190, 0.0
          %v1207 = vmax.f32 %v1191, 0.0
          %v1208 = vmax.f32 %v1192, 0.0
          %v1209 = vmax.f32 %v1193, 0.0
          %v1210 = vmax.f32 %v1194, 0.0
          %v1211 = vmax.f32 %v1195, 0.0
          %v1212 = vmax.f32 %v1196, 0.0
          %v1213 = vmax.f32 %v1197, 0.0
          %v1214 = vmax.f32 %v1198, 0.0
          %v1215 = vmax.f32 %v1199, 0.0
          %v1216 = vmax.f32 %v1200, 0.0
          %v1217 = vmax.f32 %v1201, 0.0
          %v1218 = vmax.f32 %v1202, 0.0
          %v1219 = vmax.f32 %v1203, 0.0
          %v1220 = vld [vmem:[%s7] sm:$0xff]
          %v1221 = vld [vmem:[%s7 + $0x8] sm:$0xff]
          %v1222 = vld [vmem:[%s7 + $0x10] sm:$0xff]
          %v1223 = vld [vmem:[%s7 + $0x18] sm:$0xff]
          %v1224 = vld [vmem:[%s7 + $0x20] sm:$0xff]
          %v1225 = vld [vmem:[%s7 + $0x28] sm:$0xff]
          %v1226 = vld [vmem:[%s7 + $0x30] sm:$0xff]
          %v1227 = vld [vmem:[%s7 + $0x38] sm:$0xff]
          %v1228 = vld [vmem:[%s7 + $0x40] sm:$0xff]
          %v1229 = vld [vmem:[%s7 + $0x48] sm:$0xff]
          %v1230 = vld [vmem:[%s7 + $0x50] sm:$0xff]
          %v1231 = vld [vmem:[%s7 + $0x58] sm:$0xff]
          %v1232 = vld [vmem:[%s7 + $0x60] sm:$0xff]
          %v1233 = vld [vmem:[%s7 + $0x68] sm:$0xff]
          %v1234 = vld [vmem:[%s7 + $0x70] sm:$0xff]
          %v1235 = vld [vmem:[%s7 + $0x78] sm:$0xff]
          %1237 = vset.pattern.permute.xlu0 0
          %1238 = vperm.xlu0 %1237, %v1220
          %v1239 = vpop.permute.xlu0 %1238
          %1242 = vset.pattern.permute.xlu0 0
          %1243 = vperm.xlu0 %1242, %v1221
          %v1244 = vpop.permute.xlu0 %1243
          %1247 = vset.pattern.permute.xlu0 0
          %1248 = vperm.xlu0 %1247, %v1222
          %v1249 = vpop.permute.xlu0 %1248
          %1252 = vset.pattern.permute.xlu0 0
          %1253 = vperm.xlu0 %1252, %v1223
          %v1254 = vpop.permute.xlu0 %1253
          %1257 = vset.pattern.permute.xlu0 0
          %1258 = vperm.xlu0 %1257, %v1224
          %v1259 = vpop.permute.xlu0 %1258
          %1262 = vset.pattern.permute.xlu0 0
          %1263 = vperm.xlu0 %1262, %v1225
          %v1264 = vpop.permute.xlu0 %1263
          %1267 = vset.pattern.permute.xlu0 0
          %1268 = vperm.xlu0 %1267, %v1226
          %v1269 = vpop.permute.xlu0 %1268
          %1272 = vset.pattern.permute.xlu0 0
          %1273 = vperm.xlu0 %1272, %v1227
          %v1274 = vpop.permute.xlu0 %1273
          %1277 = vset.pattern.permute.xlu0 0
          %1278 = vperm.xlu0 %1277, %v1228
          %v1279 = vpop.permute.xlu0 %1278
          %1282 = vset.pattern.permute.xlu0 0
          %1283 = vperm.xlu0 %1282, %v1229
          %v1284 = vpop.permute.xlu0 %1283
          %1287 = vset.pattern.permute.xlu0 0
          %1288 = vperm.xlu0 %1287, %v1230
          %v1289 = vpop.permute.xlu0 %1288
          %1292 = vset.pattern.permute.xlu0 0
          %1293 = vperm.xlu0 %1292, %v1231
          %v1294 = vpop.permute.xlu0 %1293
          %1297 = vset.pattern.permute.xlu0 0
          %1298 = vperm.xlu0 %1297, %v1232
          %v1299 = vpop.permute.xlu0 %1298
          %1302 = vset.pattern.permute.xlu0 0
          %1303 = vperm.xlu0 %1302, %v1233
          %v1304 = vpop.permute.xlu0 %1303
          %1307 = vset.pattern.permute.xlu0 0
          %1308 = vperm.xlu0 %1307, %v1234
          %v1309 = vpop.permute.xlu0 %1308
          %1312 = vset.pattern.permute.xlu0 0
          %1313 = vperm.xlu0 %1312, %v1235
          %v1314 = vpop.permute.xlu0 %1313
          %v1316 = vmul.f32 %v1204, %v1239
          %v1317 = vmul.f32 %v1205, %v1244
          %v1318 = vmul.f32 %v1206, %v1249
          %v1319 = vmul.f32 %v1207, %v1254
          %v1320 = vmul.f32 %v1208, %v1259
          %v1321 = vmul.f32 %v1209, %v1264
          %v1322 = vmul.f32 %v1210, %v1269
          %v1323 = vmul.f32 %v1211, %v1274
          %v1324 = vmul.f32 %v1212, %v1279
          %v1325 = vmul.f32 %v1213, %v1284
          %v1326 = vmul.f32 %v1214, %v1289
          %v1327 = vmul.f32 %v1215, %v1294
          %v1328 = vmul.f32 %v1216, %v1299
          %v1329 = vmul.f32 %v1217, %v1304
          %v1330 = vmul.f32 %v1218, %v1309
          %v1331 = vmul.f32 %v1219, %v1314
          %v1332 = vadd.f32 %v1155, %v1316
          %v1333 = vadd.f32 %v1156, %v1317
          %v1334 = vadd.f32 %v1157, %v1318
          %v1335 = vadd.f32 %v1158, %v1319
          %v1336 = vadd.f32 %v1159, %v1320
          %v1337 = vadd.f32 %v1160, %v1321
          %v1338 = vadd.f32 %v1161, %v1322
          %v1339 = vadd.f32 %v1162, %v1323
          %v1340 = vadd.f32 %v1163, %v1324
          %v1341 = vadd.f32 %v1164, %v1325
          %v1342 = vadd.f32 %v1165, %v1326
          %v1343 = vadd.f32 %v1166, %v1327
          %v1344 = vadd.f32 %v1167, %v1328
          %v1345 = vadd.f32 %v1168, %v1329
          %v1346 = vadd.f32 %v1169, %v1330
          %v1347 = vadd.f32 %v1170, %v1331
          %v1348 = vperm.slane %v404, 2
          %v1349 = vmul.f32 %v1332, %v1348
          %v1350 = vmul.f32 %v1333, %v1348
          %v1351 = vmul.f32 %v1334, %v1348
          %v1352 = vmul.f32 %v1335, %v1348
          %v1353 = vmul.f32 %v1336, %v1348
          %v1354 = vmul.f32 %v1337, %v1348
          %v1355 = vmul.f32 %v1338, %v1348
          %v1356 = vmul.f32 %v1339, %v1348
          %v1357 = vmul.f32 %v1340, %v1348
          %v1358 = vmul.f32 %v1341, %v1348
          %v1359 = vmul.f32 %v1342, %v1348
          %v1360 = vmul.f32 %v1343, %v1348
          %v1361 = vmul.f32 %v1344, %v1348
          %v1362 = vmul.f32 %v1345, %v1348
          %v1363 = vmul.f32 %v1346, %v1348
          %v1364 = vmul.f32 %v1347, %v1348
          %v1365 = vperm.slane %v404, 3
          %v1366 = vadd.f32 %v1349, %v1365
          %v1367 = vadd.f32 %v1350, %v1365
          %v1368 = vadd.f32 %v1351, %v1365
          %v1369 = vadd.f32 %v1352, %v1365
          %v1370 = vadd.f32 %v1353, %v1365
          %v1371 = vadd.f32 %v1354, %v1365
          %v1372 = vadd.f32 %v1355, %v1365
          %v1373 = vadd.f32 %v1356, %v1365
          %v1374 = vadd.f32 %v1357, %v1365
          %v1375 = vadd.f32 %v1358, %v1365
          %v1376 = vadd.f32 %v1359, %v1365
          %v1377 = vadd.f32 %v1360, %v1365
          %v1378 = vadd.f32 %v1361, %v1365
          %v1379 = vadd.f32 %v1362, %v1365
          %v1380 = vadd.f32 %v1363, %v1365
          %v1381 = vadd.f32 %v1364, %v1365
          %p1382 = scmp.lt.s32.totalorder %s28, 2
          // Predicated region
          $region77: #{tpu_custom_call.1} parent=75 // pred_check
            %p1383 = pneg %p1382
          $region78: #{tpu_custom_call.1} parent=75 // pred_check_branch
            %1385 = sbr.rel (%p1383) target = $region80
          $region79: #{tpu_custom_call.1} parent=75 // pred_region
            %v1386 = vmax.f32 %v1366, 0.0
            %v1387 = vmax.f32 %v1367, 0.0
            %v1388 = vmax.f32 %v1368, 0.0
            %v1389 = vmax.f32 %v1369, 0.0
            %v1390 = vmax.f32 %v1370, 0.0
            %v1391 = vmax.f32 %v1371, 0.0
            %v1392 = vmax.f32 %v1372, 0.0
            %v1393 = vmax.f32 %v1373, 0.0
            %v1394 = vmax.f32 %v1374, 0.0
            %v1395 = vmax.f32 %v1375, 0.0
            %v1396 = vmax.f32 %v1376, 0.0
            %v1397 = vmax.f32 %v1377, 0.0
            %v1398 = vmax.f32 %v1378, 0.0
            %v1399 = vmax.f32 %v1379, 0.0
            %v1400 = vmax.f32 %v1380, 0.0
            %v1401 = vmax.f32 %v1381, 0.0
            %1402 = vst [vmem:[#allocation2] sm:$0xff] %v1386
            %1403 = vst [vmem:[#allocation2 + $0x8] sm:$0xff] %v1387
            %1404 = vst [vmem:[#allocation2 + $0x10] sm:$0xff] %v1388
            %1405 = vst [vmem:[#allocation2 + $0x18] sm:$0xff] %v1389
            %1406 = vst [vmem:[#allocation2 + $0x20] sm:$0xff] %v1390
            %1407 = vst [vmem:[#allocation2 + $0x28] sm:$0xff] %v1391
            %1408 = vst [vmem:[#allocation2 + $0x30] sm:$0xff] %v1392
            %1409 = vst [vmem:[#allocation2 + $0x38] sm:$0xff] %v1393
            %1410 = vst [vmem:[#allocation2 + $0x40] sm:$0xff] %v1394
            %1411 = vst [vmem:[#allocation2 + $0x48] sm:$0xff] %v1395
            %1412 = vst [vmem:[#allocation2 + $0x50] sm:$0xff] %v1396
            %1413 = vst [vmem:[#allocation2 + $0x58] sm:$0xff] %v1397
            %1414 = vst [vmem:[#allocation2 + $0x60] sm:$0xff] %v1398
            %1415 = vst [vmem:[#allocation2 + $0x68] sm:$0xff] %v1399
            %1416 = vst [vmem:[#allocation2 + $0x70] sm:$0xff] %v1400
            %1417 = vst [vmem:[#allocation2 + $0x78] sm:$0xff] %v1401
            %v1418 = vld [vmem:[#allocation3] sm:$0xff]
            %v1419 = vld [vmem:[#allocation3 + $0x8] sm:$0xff]
            %v1420 = vld [vmem:[#allocation3 + $0x10] sm:$0xff]
            %v1421 = vld [vmem:[#allocation3 + $0x18] sm:$0xff]
            %v1422 = vld [vmem:[#allocation3 + $0x20] sm:$0xff]
            %v1423 = vld [vmem:[#allocation3 + $0x28] sm:$0xff]
            %v1424 = vld [vmem:[#allocation3 + $0x30] sm:$0xff]
            %v1425 = vld [vmem:[#allocation3 + $0x38] sm:$0xff]
            %v1426 = vld [vmem:[#allocation3 + $0x40] sm:$0xff]
            %v1427 = vld [vmem:[#allocation3 + $0x48] sm:$0xff]
            %v1428 = vld [vmem:[#allocation3 + $0x50] sm:$0xff]
            %v1429 = vld [vmem:[#allocation3 + $0x58] sm:$0xff]
            %v1430 = vld [vmem:[#allocation3 + $0x60] sm:$0xff]
            %v1431 = vld [vmem:[#allocation3 + $0x68] sm:$0xff]
            %v1432 = vld [vmem:[#allocation3 + $0x70] sm:$0xff]
            %v1433 = vld [vmem:[#allocation3 + $0x78] sm:$0xff]
            %v1434 = vadd.f32 %v1418, %v1386
            %v1435 = vadd.f32 %v1419, %v1387
            %v1436 = vadd.f32 %v1420, %v1388
            %v1437 = vadd.f32 %v1421, %v1389
            %v1438 = vadd.f32 %v1422, %v1390
            %v1439 = vadd.f32 %v1423, %v1391
            %v1440 = vadd.f32 %v1424, %v1392
            %v1441 = vadd.f32 %v1425, %v1393
            %v1442 = vadd.f32 %v1426, %v1394
            %v1443 = vadd.f32 %v1427, %v1395
            %v1444 = vadd.f32 %v1428, %v1396
            %v1445 = vadd.f32 %v1429, %v1397
            %v1446 = vadd.f32 %v1430, %v1398
            %v1447 = vadd.f32 %v1431, %v1399
            %v1448 = vadd.f32 %v1432, %v1400
            %v1449 = vadd.f32 %v1433, %v1401
            %1450 = vst [vmem:[#allocation3] sm:$0xff] %v1434
            %1451 = vst [vmem:[#allocation3 + $0x8] sm:$0xff] %v1435
            %1452 = vst [vmem:[#allocation3 + $0x10] sm:$0xff] %v1436
            %1453 = vst [vmem:[#allocation3 + $0x18] sm:$0xff] %v1437
            %1454 = vst [vmem:[#allocation3 + $0x20] sm:$0xff] %v1438
            %1455 = vst [vmem:[#allocation3 + $0x28] sm:$0xff] %v1439
            %1456 = vst [vmem:[#allocation3 + $0x30] sm:$0xff] %v1440
            %1457 = vst [vmem:[#allocation3 + $0x38] sm:$0xff] %v1441
            %1458 = vst [vmem:[#allocation3 + $0x40] sm:$0xff] %v1442
            %1459 = vst [vmem:[#allocation3 + $0x48] sm:$0xff] %v1443
            %1460 = vst [vmem:[#allocation3 + $0x50] sm:$0xff] %v1444
            %1461 = vst [vmem:[#allocation3 + $0x58] sm:$0xff] %v1445
            %1462 = vst [vmem:[#allocation3 + $0x60] sm:$0xff] %v1446
            %1463 = vst [vmem:[#allocation3 + $0x68] sm:$0xff] %v1447
            %1464 = vst [vmem:[#allocation3 + $0x70] sm:$0xff] %v1448
            %1465 = vst [vmem:[#allocation3 + $0x78] sm:$0xff] %v1449
          $region80: #{tpu_custom_call.1} parent=75 // pred_fallthru
            _
          %p1466 = scmp.eq.s32.totalorder %s28, 2
          // Predicated region
          $region81: #{tpu_custom_call.1} parent=75 // pred_check
            %p1467 = pneg %p1466
          $region82: #{tpu_custom_call.1} parent=75 // pred_check_branch
            %1469 = sbr.rel (%p1467) target = $region84
          $region83: #{tpu_custom_call.1} parent=75 // pred_region
            %v1470 = vld [vmem:[#allocation3] sm:$0xff]
            %v1471 = vld [vmem:[#allocation3 + $0x8] sm:$0xff]
            %v1472 = vld [vmem:[#allocation3 + $0x10] sm:$0xff]
            %v1473 = vld [vmem:[#allocation3 + $0x18] sm:$0xff]
            %v1474 = vld [vmem:[#allocation3 + $0x20] sm:$0xff]
            %v1475 = vld [vmem:[#allocation3 + $0x28] sm:$0xff]
            %v1476 = vld [vmem:[#allocation3 + $0x30] sm:$0xff]
            %v1477 = vld [vmem:[#allocation3 + $0x38] sm:$0xff]
            %v1478 = vld [vmem:[#allocation3 + $0x40] sm:$0xff]
            %v1479 = vld [vmem:[#allocation3 + $0x48] sm:$0xff]
            %v1480 = vld [vmem:[#allocation3 + $0x50] sm:$0xff]
            %v1481 = vld [vmem:[#allocation3 + $0x58] sm:$0xff]
            %v1482 = vld [vmem:[#allocation3 + $0x60] sm:$0xff]
            %v1483 = vld [vmem:[#allocation3 + $0x68] sm:$0xff]
            %v1484 = vld [vmem:[#allocation3 + $0x70] sm:$0xff]
            %v1485 = vld [vmem:[#allocation3 + $0x78] sm:$0xff]
            %v1486 = vadd.f32 %v1470, %v1366
            %v1487 = vadd.f32 %v1471, %v1367
            %v1488 = vadd.f32 %v1472, %v1368
            %v1489 = vadd.f32 %v1473, %v1369
            %v1490 = vadd.f32 %v1474, %v1370
            %v1491 = vadd.f32 %v1475, %v1371
            %v1492 = vadd.f32 %v1476, %v1372
            %v1493 = vadd.f32 %v1477, %v1373
            %v1494 = vadd.f32 %v1478, %v1374
            %v1495 = vadd.f32 %v1479, %v1375
            %v1496 = vadd.f32 %v1480, %v1376
            %v1497 = vadd.f32 %v1481, %v1377
            %v1498 = vadd.f32 %v1482, %v1378
            %v1499 = vadd.f32 %v1483, %v1379
            %v1500 = vadd.f32 %v1484, %v1380
            %v1501 = vadd.f32 %v1485, %v1381
            %1502 = vst [vmem:[#allocation13] sm:$0xff] %v1486
            %1503 = vst [vmem:[#allocation13 + $0x8] sm:$0xff] %v1487
            %1504 = vst [vmem:[#allocation13 + $0x10] sm:$0xff] %v1488
            %1505 = vst [vmem:[#allocation13 + $0x18] sm:$0xff] %v1489
            %1506 = vst [vmem:[#allocation13 + $0x20] sm:$0xff] %v1490
            %1507 = vst [vmem:[#allocation13 + $0x28] sm:$0xff] %v1491
            %1508 = vst [vmem:[#allocation13 + $0x30] sm:$0xff] %v1492
            %1509 = vst [vmem:[#allocation13 + $0x38] sm:$0xff] %v1493
            %1510 = vst [vmem:[#allocation13 + $0x40] sm:$0xff] %v1494
            %1511 = vst [vmem:[#allocation13 + $0x48] sm:$0xff] %v1495
            %1512 = vst [vmem:[#allocation13 + $0x50] sm:$0xff] %v1496
            %1513 = vst [vmem:[#allocation13 + $0x58] sm:$0xff] %v1497
            %1514 = vst [vmem:[#allocation13 + $0x60] sm:$0xff] %v1498
            %1515 = vst [vmem:[#allocation13 + $0x68] sm:$0xff] %v1499
            %1516 = vst [vmem:[#allocation13 + $0x70] sm:$0xff] %v1500
            %1517 = vst [vmem:[#allocation13 + $0x78] sm:$0xff] %v1501
          $region84: #{tpu_custom_call.1} parent=75 // pred_fallthru
            _
        $region76: #{tpu_custom_call.1} parent=51 // pred_fallthru
          _
        // Predicated region
        $region85: #{tpu_custom_call.1} parent=51 // pred_check
          %p1518 = pneg %p234
        $region86: #{tpu_custom_call.1} parent=51 // pred_check_branch
          %1520 = sbr.rel (%p1518) target = $region88
        $region87: #{tpu_custom_call.1} parent=51 // pred_region
          %1522 = vsyncadd [#allocation9], 0
          %s1523 = sshll.u32 [#allocation13], 4
          %s1524 = int_to_ptr.vmem [resolvable:$true] %s1523
          %s1525 = sshll.u32 %s8, 4
          %s1526 = int_to_ptr.hbm [resolvable:$true] %s1525
          %1531 = dma.vmem_to_hbm [thread:$0]  %s1524, 2048, %s1526, [#allocation9], 128, 128, 8
        $region88: #{tpu_custom_call.1} parent=51 // pred_fallthru
          _
        // Predicated region
        $region89: #{tpu_custom_call.1} parent=51 // pred_check
          %p1532 = pneg %p234
        $region90: #{tpu_custom_call.1} parent=51 // pred_check_branch
          %1534 = sbr.rel (%p1532) target = $region92
        $region91: #{tpu_custom_call.1} parent=51 // pred_region
          %1536 = dma.done [#allocation9], 2048
        $region92: #{tpu_custom_call.1} parent=51 // pred_fallthru
          _
      $region52: #{tpu_custom_call.1} parent=5 // pred_fallthru
        _
      %p1537 = scmp.le.s32.totalorder 2, %s19
      // Predicated region
      $region93: #{tpu_custom_call.1} parent=5 // pred_check
        %p1538 = pneg %p1537
      $region94: #{tpu_custom_call.1} parent=5 // pred_check_branch
        %1540 = sbr.rel (%p1538) target = $region96
      $region95: #{tpu_custom_call.1} parent=5 // pred_region
        %s1541 = ssub.s32 %s19, 2
      $region96: #{tpu_custom_call.1} parent=5 // pred_fallthru
        _
    $region6: #{tpu_custom_call.1} parent=1 // loop_footer
      %s23 = sadd.s32 1, %s19
    $region7: #{tpu_custom_call.1} parent=1 // loop_footer_branch
      %18 = sbr.rel target = $region3
    $region8: #{tpu_custom_call.1} parent=1 // loop_exit
      _
    %1542 = vsyncpa [#allocation8], 1
    %s1543 = scalar_lea.sflag [#allocation8], 1
    %1544 = vsyncpa %s1543, 1
    %1545 = vsyncpa [#allocation11], 1
    %s1546 = scalar_lea.sflag [#allocation11], 1
    %1547 = vsyncpa %s1546, 1
    %1548 = vsyncpa [#allocation9], 1
    %s1549 = scalar_lea.sflag [#allocation9], 1
    %1550 = vsyncpa %s1549, 1

</llo_original>
